<compile_context>
chip_gen: v7x
topology: tpu7x:2x2x1
jax: 0.10.0
libtpu: 0.0.40
codegen_flags: <defaults>
</compile_context>

<pallas_src>
import jax
import jax.numpy as jnp
from jax.experimental import pallas as pl
from jax.experimental.pallas import tpu as pltpu

D_IN, H1, H2, D_OUT = 28 * 28, 200, 50, 10
H1_PAD, H2_PAD, D_OUT_PAD = 256, 128, 128  # lane-dense padded widths (multiples of 128)


def mlp_kernel(x_ref, w1_ref, b1_ref, w2_ref, b2_ref, w3_ref, b3_ref, o_ref):
    def sigmoid(z):
        # exp on EUP; approx reciprocal also on EUP -> frees VALU slots.
        return pl.reciprocal(1.0 + jnp.exp(-z), approx=True)

    # x streamed as f32; cast to bf16 in-kernel (VPU has slack, kernel is HBM-bound).
    x = x_ref[...].astype(jnp.bfloat16)

    # Layer 1: (tb, 784)bf16 @ (784, 256)bf16 -> f32 acc, +b1 (f32), sigmoid.
    h1 = jnp.dot(x, w1_ref[...], preferred_element_type=jnp.float32)
    h1 = sigmoid(h1 + b1_ref[...])

    # Layer 2: (tb, 256) @ (256, 128).
    h2 = jnp.dot(h1.astype(jnp.bfloat16), w2_ref[...], preferred_element_type=jnp.float32)
    h2 = sigmoid(h2 + b2_ref[...])

    # Layer 3: (tb, 128) @ (128, 128) -- columns 10..127 are zero padding.
    h3 = jnp.dot(h2.astype(jnp.bfloat16), w3_ref[...], preferred_element_type=jnp.float32)
    o_ref[...] = sigmoid(h3 + b3_ref[...]).astype(o_ref.dtype)


def pack_params(p):
    """One-time packing: pad to lane-dense widths, cast weights to bf16 (biases stay f32)."""
    w1 = jnp.pad(p["w1"], ((0, 0), (0, H1_PAD - H1))).astype(jnp.bfloat16)        # (784, 256)
    b1 = jnp.pad(p["b1"], ((0, 0), (0, H1_PAD - H1)))                              # (1, 256)
    w2 = jnp.pad(p["w2"], ((0, H1_PAD - H1), (0, H2_PAD - H2))).astype(jnp.bfloat16)  # (256, 128)
    b2 = jnp.pad(p["b2"], ((0, 0), (0, H2_PAD - H2)))                              # (1, 128)
    w3 = jnp.pad(p["w3"], ((0, H2_PAD - H2), (0, D_OUT_PAD - D_OUT))).astype(jnp.bfloat16)  # (128, 128)
    b3 = jnp.pad(p["b3"], ((0, 0), (0, D_OUT_PAD - D_OUT)))                        # (1, 128)
    return (w1, b1, w2, b2, w3, b3)


def _pick_tb(B):
    # Largest tile that still gives >= 4 grid steps (>= 2 pipelined iterations per v7x TC);
    # 512/1024-row tiles reach ~85% of HBM roofline, 128 is the floor (multiple of 8 sublanes).
    for tb in (1024, 512, 256, 128):
        if B >= 4 * tb:
            return tb
    return 128


def mlp_forward(x, packed, *, tb=None):
    """x: (B, 784) float32. packed: output of pack_params. Returns (B, 10) float32."""
    B = x.shape[0]
    if tb is None:
        tb = _pick_tb(B)
    n_steps = pl.cdiv(B, tb)
    Bp = n_steps * tb
    if Bp != B:  # pad ragged batch; padded rows are sliced off below
        x = jnp.pad(x, ((0, Bp - B), (0, 0)))

    w1, b1, w2, b2, w3, b3 = packed

    cost = pl.CostEstimate(
        flops=2 * Bp * (D_IN * H1_PAD + H1_PAD * H2_PAD + H2_PAD * D_OUT_PAD),
        transcendentals=Bp * (H1_PAD + H2_PAD + D_OUT_PAD),
        bytes_accessed=(x.size * 4                                   # f32 x stream
                        + (w1.size + w2.size + w3.size) * 2          # bf16 resident weights
                        + (b1.size + b2.size + b3.size) * 4          # f32 biases
                        + Bp * D_OUT_PAD * 2),                       # bf16 output
    )

    out = pl.pallas_call(
        mlp_kernel,
        out_shape=jax.ShapeDtypeStruct((Bp, D_OUT_PAD), jnp.bfloat16),
        grid_spec=pltpu.PrefetchScalarGridSpec(
            num_scalar_prefetch=0,
            grid=(n_steps,),
            in_specs=[
                pl.BlockSpec((tb, D_IN), lambda i: (i, 0)),           # x tile (streamed, f32)
                pl.BlockSpec((D_IN, H1_PAD), lambda i: (0, 0)),       # w1 (VMEM-resident)
                pl.BlockSpec((1, H1_PAD), lambda i: (0, 0)),          # b1
                pl.BlockSpec((H1_PAD, H2_PAD), lambda i: (0, 0)),     # w2
                pl.BlockSpec((1, H2_PAD), lambda i: (0, 0)),          # b2
                pl.BlockSpec((H2_PAD, D_OUT_PAD), lambda i: (0, 0)),  # w3 (zero-padded cols)
                pl.BlockSpec((1, D_OUT_PAD), lambda i: (0, 0)),       # b3
            ],
            out_specs=pl.BlockSpec((tb, D_OUT_PAD), lambda i: (i, 0)),
        ),
        compiler_params=pltpu.CompilerParams(
            # Batch axis is embarrassingly parallel -> shards across v7x's 2 TensorCores.
            dimension_semantics=("parallel",),
            # Worst case (tb=1024): 2x f32 x tiles ~6.3 MiB + bf16 weights ~1 MiB + 2x bf16
            # out tiles ~0.5 MiB  ->  well under 32 MiB on every generation (v7x phys 64 MiB).
            vmem_limit_bytes=32 * 1024 * 1024,
        ),
        cost_estimate=cost,
    )(x, w1, b1, w2, b2, w3, b3)

    # Slice off padded rows / lanes; return f32 like the PyTorch module's default dtype.
    return out[:B, :D_OUT].astype(jnp.float32)


def init_params(key):
    """Deterministic init mimicking nn.Linear default: U(-1/sqrt(fan_in), 1/sqrt(fan_in))."""
    ks = jax.random.split(key, 6)

    def linear(kw, kb, fan_in, fan_out):
        bound = 1.0 / jnp.sqrt(fan_in)
        w = jax.random.uniform(kw, (fan_in, fan_out), jnp.float32, -bound, bound)
        b = jax.random.uniform(kb, (1, fan_out), jnp.float32, -bound, bound)
        return w, b

    w1, b1 = linear(ks[0], ks[1], D_IN, H1)
    w2, b2 = linear(ks[2], ks[3], H1, H2)
    w3, b3 = linear(ks[4], ks[5], H2, D_OUT)
    return {"w1": w1, "b1": b1, "w2": w2, "b2": b2, "w3": w3, "b3": b3}


def reference_forward(x, p):
    h = jax.nn.sigmoid(x @ p["w1"] + p["b1"])
    h = jax.nn.sigmoid(h @ p["w2"] + p["b2"])
    return jax.nn.sigmoid(h @ p["w3"] + p["b3"])


if __name__ == "__main__":
    key = jax.random.PRNGKey(0)
    kx, kp = jax.random.split(key)
    params = init_params(kp)
    packed = pack_params(params)  # one-time weight packing (hoisted out of the forward path)

    # Main check: B=512 -> tb=128, 4 parallel grid steps (>= 2 per v7x TensorCore).
    B = 512
    x = jax.random.normal(kx, (B, D_IN), dtype=jnp.float32)
    out = jax.block_until_ready(mlp_forward(x, packed))
    ref = reference_forward(x, params)
    assert out.shape == (B, D_OUT)
    # bf16 weights/activations + bf16 output store + approx reciprocal -> loosened tolerance.
    assert jnp.allclose(out, ref, atol=2e-2, rtol=0.0), "Pallas output mismatch vs JAX reference"

    # Ragged-batch check: exercises batch zero-padding + padded-lane slicing.
    B2 = 77
    x2 = jax.random.normal(jax.random.fold_in(kx, 1), (B2, D_IN), dtype=jnp.float32)
    out2 = jax.block_until_ready(mlp_forward(x2, packed))
    ref2 = reference_forward(x2, params)
    assert out2.shape == (B2, D_OUT)
    assert jnp.allclose(out2, ref2, atol=2e-2, rtol=0.0), "Pallas output mismatch (ragged batch)"

    print("KERNEL_OK")
</pallas_src>

<mosaic_0001>
module attributes {stable_mosaic.version = 11 : i64} {
  func.func @mlp_kernel(%arg0: i32, %arg1: memref<128x784xf32, #tpu.memory_space<vmem>>, %arg2: memref<784x256xbf16, #tpu.memory_space<vmem>>, %arg3: memref<1x256xf32, #tpu.memory_space<vmem>>, %arg4: memref<256x128xbf16, #tpu.memory_space<vmem>>, %arg5: memref<1x128xf32, #tpu.memory_space<vmem>>, %arg6: memref<128x128xbf16, #tpu.memory_space<vmem>>, %arg7: memref<1x128xf32, #tpu.memory_space<vmem>>, %arg8: memref<128x128xbf16, #tpu.memory_space<vmem>>) attributes {dimension_semantics = [#tpu.dimension_semantics<parallel>], iteration_bounds = array<i64: 4>, scalar_prefetch = 0 : i64, scratch_operands = 0 : i64, tpu.core_type = #tpu.core_type<tc>, window_params = [{transform_indices = @transform_0, window_bounds = array<i64: 128, 784>}, {pipeline_mode = #tpu.pipeline_mode<synchronous>, transform_indices = @transform_1, window_bounds = array<i64: 784, 256>}, {pipeline_mode = #tpu.pipeline_mode<synchronous>, transform_indices = @transform_2, window_bounds = array<i64: 1, 256>}, {pipeline_mode = #tpu.pipeline_mode<synchronous>, transform_indices = @transform_3, window_bounds = array<i64: 256, 128>}, {pipeline_mode = #tpu.pipeline_mode<synchronous>, transform_indices = @transform_4, window_bounds = array<i64: 1, 128>}, {pipeline_mode = #tpu.pipeline_mode<synchronous>, transform_indices = @transform_5, window_bounds = array<i64: 128, 128>}, {pipeline_mode = #tpu.pipeline_mode<synchronous>, transform_indices = @transform_6, window_bounds = array<i64: 1, 128>}, {transform_indices = @transform_7, window_bounds = array<i64: 128, 128>}]} {
    %c0 = arith.constant 0 : index
    %c0_0 = arith.constant 0 : index
    %0 = vector.load %arg1[%c0, %c0_0] : memref<128x784xf32, #tpu.memory_space<vmem>>, vector<128x784xf32>
    %1 = arith.truncf %0 : vector<128x784xf32> to vector<128x784xbf16>
    %c0_1 = arith.constant 0 : index
    %c0_2 = arith.constant 0 : index
    %2 = vector.load %arg2[%c0_1, %c0_2] : memref<784x256xbf16, #tpu.memory_space<vmem>>, vector<784x256xbf16>
    %cst = arith.constant dense<0.000000e+00> : vector<128x256xf32>
    %3 = tpu.matmul %1, %2, %cst {dimension_numbers = #tpu.dot_dimension_numbers<[1], [0], [0], [1], [0, 0, 1, 1], [], []>} : vector<128x784xbf16>, vector<784x256xbf16>, vector<128x256xf32> -> vector<128x256xf32>
    %c0_3 = arith.constant 0 : index
    %c0_4 = arith.constant 0 : index
    %4 = vector.load %arg3[%c0_3, %c0_4] : memref<1x256xf32, #tpu.memory_space<vmem>>, vector<1x256xf32>
    %5 = vector.broadcast %4 : vector<1x256xf32> to vector<128x256xf32>
    %6 = arith.addf %3, %5 : vector<128x256xf32>
    %cst_5 = arith.constant 0.000000e+00 : f32
    %7 = vector.broadcast %cst_5 : f32 to vector<128x256xf32>
    %8 = arith.subf %7, %6 : vector<128x256xf32>
    %9 = math.exp %8 : vector<128x256xf32>
    %cst_6 = arith.constant 1.000000e+00 : f32
    %10 = vector.broadcast %cst_6 : f32 to vector<128x256xf32>
    %11 = arith.addf %10, %9 : vector<128x256xf32>
    %12 = tpu.reciprocal %11 {approx = true} : vector<128x256xf32> -> vector<128x256xf32>
    %13 = arith.truncf %12 : vector<128x256xf32> to vector<128x256xbf16>
    %c0_7 = arith.constant 0 : index
    %c0_8 = arith.constant 0 : index
    %14 = vector.load %arg4[%c0_7, %c0_8] : memref<256x128xbf16, #tpu.memory_space<vmem>>, vector<256x128xbf16>
    %cst_9 = arith.constant dense<0.000000e+00> : vector<128x128xf32>
    %15 = tpu.matmul %13, %14, %cst_9 {dimension_numbers = #tpu.dot_dimension_numbers<[1], [0], [0], [1], [0, 0, 1, 1], [], []>} : vector<128x256xbf16>, vector<256x128xbf16>, vector<128x128xf32> -> vector<128x128xf32>
    %c0_10 = arith.constant 0 : index
    %c0_11 = arith.constant 0 : index
    %16 = vector.load %arg5[%c0_10, %c0_11] : memref<1x128xf32, #tpu.memory_space<vmem>>, vector<1x128xf32>
    %17 = vector.broadcast %16 : vector<1x128xf32> to vector<128x128xf32>
    %18 = arith.addf %15, %17 : vector<128x128xf32>
    %cst_12 = arith.constant 0.000000e+00 : f32
    %19 = vector.broadcast %cst_12 : f32 to vector<128x128xf32>
    %20 = arith.subf %19, %18 : vector<128x128xf32>
    %21 = math.exp %20 : vector<128x128xf32>
    %cst_13 = arith.constant 1.000000e+00 : f32
    %22 = vector.broadcast %cst_13 : f32 to vector<128x128xf32>
    %23 = arith.addf %22, %21 : vector<128x128xf32>
    %24 = tpu.reciprocal %23 {approx = true} : vector<128x128xf32> -> vector<128x128xf32>
    %25 = arith.truncf %24 : vector<128x128xf32> to vector<128x128xbf16>
    %c0_14 = arith.constant 0 : index
    %c0_15 = arith.constant 0 : index
    %26 = vector.load %arg6[%c0_14, %c0_15] : memref<128x128xbf16, #tpu.memory_space<vmem>>, vector<128x128xbf16>
    %cst_16 = arith.constant dense<0.000000e+00> : vector<128x128xf32>
    %27 = tpu.matmul %25, %26, %cst_16 {dimension_numbers = #tpu.dot_dimension_numbers<[1], [0], [0], [1], [0, 0, 1, 1], [], []>} : vector<128x128xbf16>, vector<128x128xbf16>, vector<128x128xf32> -> vector<128x128xf32>
    %c0_17 = arith.constant 0 : index
    %c0_18 = arith.constant 0 : index
    %28 = vector.load %arg7[%c0_17, %c0_18] : memref<1x128xf32, #tpu.memory_space<vmem>>, vector<1x128xf32>
    %29 = vector.broadcast %28 : vector<1x128xf32> to vector<128x128xf32>
    %30 = arith.addf %27, %29 : vector<128x128xf32>
    %cst_19 = arith.constant 0.000000e+00 : f32
    %31 = vector.broadcast %cst_19 : f32 to vector<128x128xf32>
    %32 = arith.subf %31, %30 : vector<128x128xf32>
    %33 = math.exp %32 : vector<128x128xf32>
    %cst_20 = arith.constant 1.000000e+00 : f32
    %34 = vector.broadcast %cst_20 : f32 to vector<128x128xf32>
    %35 = arith.addf %34, %33 : vector<128x128xf32>
    %36 = tpu.reciprocal %35 {approx = true} : vector<128x128xf32> -> vector<128x128xf32>
    %37 = arith.truncf %36 : vector<128x128xf32> to vector<128x128xbf16>
    %c0_21 = arith.constant 0 : index
    %c0_22 = arith.constant 0 : index
    %38 = vector.load %arg8[%c0_21, %c0_22] : memref<128x128xbf16, #tpu.memory_space<vmem>>, vector<128x128xbf16>
    tpu.vector_store %arg8[%c0_21, %c0_22], %37 {strides = array<i32>} : memref<128x128xbf16, #tpu.memory_space<vmem>>, vector<128x128xbf16>,
    return
  }
  func.func @transform_0(%arg0: i32) -> (i32, i32) {
    %c0_i32 = arith.constant 0 : i32
    %c0_i32_0 = arith.constant 0 : i32
    return %arg0, %c0_i32 : i32, i32
  }
  func.func @transform_1(%arg0: i32) -> (i32, i32) {
    %c0_i32 = arith.constant 0 : i32
    %c0_i32_0 = arith.constant 0 : i32
    %c0_i32_1 = arith.constant 0 : i32
    return %c0_i32, %c0_i32_0 : i32, i32
  }
  func.func @transform_2(%arg0: i32) -> (i32, i32) {
    %c0_i32 = arith.constant 0 : i32
    %c0_i32_0 = arith.constant 0 : i32
    %c0_i32_1 = arith.constant 0 : i32
    return %c0_i32, %c0_i32_0 : i32, i32
  }
  func.func @transform_3(%arg0: i32) -> (i32, i32) {
    %c0_i32 = arith.constant 0 : i32
    %c0_i32_0 = arith.constant 0 : i32
    %c0_i32_1 = arith.constant 0 : i32
    return %c0_i32, %c0_i32_0 : i32, i32
  }
  func.func @transform_4(%arg0: i32) -> (i32, i32) {
    %c0_i32 = arith.constant 0 : i32
    %c0_i32_0 = arith.constant 0 : i32
    %c0_i32_1 = arith.constant 0 : i32
    return %c0_i32, %c0_i32_0 : i32, i32
  }
  func.func @transform_5(%arg0: i32) -> (i32, i32) {
    %c0_i32 = arith.constant 0 : i32
    %c0_i32_0 = arith.constant 0 : i32
    %c0_i32_1 = arith.constant 0 : i32
    return %c0_i32, %c0_i32_0 : i32, i32
  }
  func.func @transform_6(%arg0: i32) -> (i32, i32) {
    %c0_i32 = arith.constant 0 : i32
    %c0_i32_0 = arith.constant 0 : i32
    %c0_i32_1 = arith.constant 0 : i32
    return %c0_i32, %c0_i32_0 : i32, i32
  }
  func.func @transform_7(%arg0: i32) -> (i32, i32) {
    %c0_i32 = arith.constant 0 : i32
    %c0_i32_0 = arith.constant 0 : i32
    return %arg0, %c0_i32 : i32, i32
  }
}

</mosaic_0001>

<llo_original>
// kernel: tpu_custom_call.1
$region0: #{tpu_custom_call.1}
  #allocation0 [shape = 'u32[]', space=smem, size = 0x4, offset = 0x4, fixed_abs, tag = 'smem constant byte address 0x4 - core index']
  #allocation1 [shape = 'u32[144,128]{1,0:T(1,128)}', space=vmem, size = 0x12000, scoped, tag = 'internal scratch']
  %s0 = inlined_call_operand.vmem [shape: f32[512,784], index: 0, kind: input, shape index: {}]
  %s1 = inlined_call_operand.vmem [shape: bf16[784,256], index: 1, kind: input, shape index: {}]
  %s2 = inlined_call_operand.vmem [shape: f32[1,256], index: 2, kind: input, shape index: {}]
  %s3 = inlined_call_operand.vmem [shape: bf16[256,128], index: 3, kind: input, shape index: {}]
  %s4 = inlined_call_operand.vmem [shape: f32[1,128], index: 4, kind: input, shape index: {}]
  %s5 = inlined_call_operand.vmem [shape: bf16[128,128], index: 5, kind: input, shape index: {}]
  %s6 = inlined_call_operand.vmem [shape: f32[1,128], index: 6, kind: input, shape index: {}]
  %s7 = inlined_call_operand.hbm [shape: bf16[512,128], index: 7, kind: output, shape index: {}]
  %s8 = sld [smem:[#allocation0]]
  $region61: #{tpu_custom_call.1} parent=0
    _
  %s10 = ssub.s32 1, %s8
  %s11 = scalar_select 0, %s10, %s8
  $region1: #{tpu_custom_call.1} parent=0
    #allocation2 [shape = 'u8[65536]{0}', space=vmem, size = 0x10000, scoped, tag = 'output window, operand 0']
    #allocation3 [shape = 's32[2]{0}', space=sflag, size = 0x8, scoped, tag = 'scoped memory for tpu_custom_call.1']
    %12 = vsyncpa [#allocation3], 0
    %s13 = scalar_lea.sflag [#allocation3], 1
    %14 = vsyncpa %s13, 0
    loop: start=0, step=1, limit=6
    $region2: #{tpu_custom_call.1} parent=1 // loop_pre_header
      _
    $region3: #{tpu_custom_call.1} parent=1 // loop_header
      %s16 = sphi 0, %s20
      %p17 = scmp.ge.s32.totalorder %s16, 6
      %s26 = sphi 0, %s28
      %s29 = sphi 0, %s26
      %s30 = sphi 0, %s29
      %s46 = sphi 0, %s30
      %s50 = sphi 0, %s50
      %s52 = sphi 0, %s50
      %s53 = sphi 0, %s52
      %s67 = sphi 0, %s53
      %s71 = sphi 0, %s71
      %s73 = sphi 0, %s71
      %s74 = sphi 0, %s73
      %s88 = sphi 0, %s74
      %s92 = sphi 0, %s92
      %s94 = sphi 0, %s92
      %s95 = sphi 0, %s94
      %s109 = sphi 0, %s95
      %s113 = sphi 0, %s113
      %s115 = sphi 0, %s113
      %s116 = sphi 0, %s115
      %s130 = sphi 0, %s116
      %s134 = sphi 0, %s134
      %s136 = sphi 0, %s134
      %s137 = sphi 0, %s136
      %s151 = sphi 0, %s137
      %s155 = sphi 0, %s155
      %s157 = sphi 0, %s155
      %s158 = sphi 0, %s157
      %s172 = sphi 0, %s158
      %s178 = sphi 0, %s180
      %s181 = sphi 0, %s178
      %s182 = sphi 0, %s181
      %s198 = sphi 0, %s182
    $region4: #{tpu_custom_call.1} parent=1 // loop_header_branch
      %19 = sbr.rel (%p17) target = $region8
    $region5: #{tpu_custom_call.1} parent=1 // loop_body
      %s21 = ssub.s32 %s16, 1
      %s22 = ssub.s32 %s16, 2
      %s23 = sadd.s32 %s16, 1
      %s24 = ssub.s32 %s16, %s23
      %p25 = scmp.eq.s32.totalorder %s24, 0
      %s27 = sadd.s32 %s26, 1
      %s28 = scalar_select %p25, %s26, %s27
      %p31 = pneg %p25
      %p32 = scmp.eq.s32.totalorder %s16, 3
      %p33 = por %p31, %p32
      %p34 = scmp.ne.s32.totalorder %s26, %s29
      %p35 = scmp.eq.s32.totalorder %s16, 0
      %p36 = por %p34, %p35
      %p37 = scmp.ne.s32.totalorder %s26, %s29
      %p38 = scmp.eq.s32.totalorder %s21, 3
      %p39 = por %p37, %p38
      %p40 = scmp.ne.s32.totalorder %s29, %s30
      %p41 = scmp.eq.s32.totalorder %s21, 0
      %p42 = por %p40, %p41
      %p43 = scmp.ne.s32.totalorder %s29, %s30
      %p44 = scmp.eq.s32.totalorder %s22, 3
      %p45 = por %p43, %p44
      %p47 = scmp.ne.s32.totalorder %s30, %s46
      %p48 = scmp.eq.s32.totalorder %s22, 0
      %p49 = por %p47, %p48
      %s51 = sadd.s32 %s50, 1
      %p54 = scmp.eq.s32.totalorder %s16, 3
      %p55 = scmp.ne.s32.totalorder %s50, %s52
      %p56 = scmp.eq.s32.totalorder %s16, 0
      %p57 = por %p55, %p56
      %p58 = scmp.ne.s32.totalorder %s50, %s52
      %p59 = scmp.eq.s32.totalorder %s21, 3
      %p60 = por %p58, %p59
      %p61 = scmp.ne.s32.totalorder %s52, %s53
      %p62 = scmp.eq.s32.totalorder %s21, 0
      %p63 = por %p61, %p62
      %p64 = scmp.ne.s32.totalorder %s52, %s53
      %p65 = scmp.eq.s32.totalorder %s22, 3
      %p66 = por %p64, %p65
      %p68 = scmp.ne.s32.totalorder %s53, %s67
      %p69 = scmp.eq.s32.totalorder %s22, 0
      %p70 = por %p68, %p69
      %s72 = sadd.s32 %s71, 1
      %p75 = scmp.eq.s32.totalorder %s16, 3
      %p76 = scmp.ne.s32.totalorder %s71, %s73
      %p77 = scmp.eq.s32.totalorder %s16, 0
      %p78 = por %p76, %p77
      %p79 = scmp.ne.s32.totalorder %s71, %s73
      %p80 = scmp.eq.s32.totalorder %s21, 3
      %p81 = por %p79, %p80
      %p82 = scmp.ne.s32.totalorder %s73, %s74
      %p83 = scmp.eq.s32.totalorder %s21, 0
      %p84 = por %p82, %p83
      %p85 = scmp.ne.s32.totalorder %s73, %s74
      %p86 = scmp.eq.s32.totalorder %s22, 3
      %p87 = por %p85, %p86
      %p89 = scmp.ne.s32.totalorder %s74, %s88
      %p90 = scmp.eq.s32.totalorder %s22, 0
      %p91 = por %p89, %p90
      %s93 = sadd.s32 %s92, 1
      %p96 = scmp.eq.s32.totalorder %s16, 3
      %p97 = scmp.ne.s32.totalorder %s92, %s94
      %p98 = scmp.eq.s32.totalorder %s16, 0
      %p99 = por %p97, %p98
      %p100 = scmp.ne.s32.totalorder %s92, %s94
      %p101 = scmp.eq.s32.totalorder %s21, 3
      %p102 = por %p100, %p101
      %p103 = scmp.ne.s32.totalorder %s94, %s95
      %p104 = scmp.eq.s32.totalorder %s21, 0
      %p105 = por %p103, %p104
      %p106 = scmp.ne.s32.totalorder %s94, %s95
      %p107 = scmp.eq.s32.totalorder %s22, 3
      %p108 = por %p106, %p107
      %p110 = scmp.ne.s32.totalorder %s95, %s109
      %p111 = scmp.eq.s32.totalorder %s22, 0
      %p112 = por %p110, %p111
      %s114 = sadd.s32 %s113, 1
      %p117 = scmp.eq.s32.totalorder %s16, 3
      %p118 = scmp.ne.s32.totalorder %s113, %s115
      %p119 = scmp.eq.s32.totalorder %s16, 0
      %p120 = por %p118, %p119
      %p121 = scmp.ne.s32.totalorder %s113, %s115
      %p122 = scmp.eq.s32.totalorder %s21, 3
      %p123 = por %p121, %p122
      %p124 = scmp.ne.s32.totalorder %s115, %s116
      %p125 = scmp.eq.s32.totalorder %s21, 0
      %p126 = por %p124, %p125
      %p127 = scmp.ne.s32.totalorder %s115, %s116
      %p128 = scmp.eq.s32.totalorder %s22, 3
      %p129 = por %p127, %p128
      %p131 = scmp.ne.s32.totalorder %s116, %s130
      %p132 = scmp.eq.s32.totalorder %s22, 0
      %p133 = por %p131, %p132
      %s135 = sadd.s32 %s134, 1
      %p138 = scmp.eq.s32.totalorder %s16, 3
      %p139 = scmp.ne.s32.totalorder %s134, %s136
      %p140 = scmp.eq.s32.totalorder %s16, 0
      %p141 = por %p139, %p140
      %p142 = scmp.ne.s32.totalorder %s134, %s136
      %p143 = scmp.eq.s32.totalorder %s21, 3
      %p144 = por %p142, %p143
      %p145 = scmp.ne.s32.totalorder %s136, %s137
      %p146 = scmp.eq.s32.totalorder %s21, 0
      %p147 = por %p145, %p146
      %p148 = scmp.ne.s32.totalorder %s136, %s137
      %p149 = scmp.eq.s32.totalorder %s22, 3
      %p150 = por %p148, %p149
      %p152 = scmp.ne.s32.totalorder %s137, %s151
      %p153 = scmp.eq.s32.totalorder %s22, 0
      %p154 = por %p152, %p153
      %s156 = sadd.s32 %s155, 1
      %p159 = scmp.eq.s32.totalorder %s16, 3
      %p160 = scmp.ne.s32.totalorder %s155, %s157
      %p161 = scmp.eq.s32.totalorder %s16, 0
      %p162 = por %p160, %p161
      %p163 = scmp.ne.s32.totalorder %s155, %s157
      %p164 = scmp.eq.s32.totalorder %s21, 3
      %p165 = por %p163, %p164
      %p166 = scmp.ne.s32.totalorder %s157, %s158
      %p167 = scmp.eq.s32.totalorder %s21, 0
      %p168 = por %p166, %p167
      %p169 = scmp.ne.s32.totalorder %s157, %s158
      %p170 = scmp.eq.s32.totalorder %s22, 3
      %p171 = por %p169, %p170
      %p173 = scmp.ne.s32.totalorder %s158, %s172
      %p174 = scmp.eq.s32.totalorder %s22, 0
      %p175 = por %p173, %p174
      %s176 = ssub.s32 %s16, %s23
      %p177 = scmp.eq.s32.totalorder %s176, 0
      %s179 = sadd.s32 %s178, 1
      %s180 = scalar_select %p177, %s178, %s179
      %p183 = pneg %p177
      %p184 = scmp.eq.s32.totalorder %s16, 3
      %p185 = por %p183, %p184
      %p186 = scmp.ne.s32.totalorder %s178, %s181
      %p187 = scmp.eq.s32.totalorder %s16, 0
      %p188 = por %p186, %p187
      %p189 = scmp.ne.s32.totalorder %s178, %s181
      %p190 = scmp.eq.s32.totalorder %s21, 3
      %p191 = por %p189, %p190
      %p192 = scmp.ne.s32.totalorder %s181, %s182
      %p193 = scmp.eq.s32.totalorder %s21, 0
      %p194 = por %p192, %p193
      %p195 = scmp.ne.s32.totalorder %s181, %s182
      %p196 = scmp.eq.s32.totalorder %s22, 3
      %p197 = por %p195, %p196
      %p199 = scmp.ne.s32.totalorder %s182, %s198
      %p200 = scmp.eq.s32.totalorder %s22, 0
      %p201 = por %p199, %p200
      %p202 = scmp.le.s32.totalorder 1, %s16
      %p203 = scmp.lt.s32.totalorder %s16, 5
      %p204 = pnand %p202, %p203
      %p205 = pneg %p204
      // Predicated region
      $region9: #{tpu_custom_call.1} parent=5 // pred_check
        _
      $region10: #{tpu_custom_call.1} parent=5 // pred_check_branch
        %207 = sbr.rel (%p204) target = $region12
      $region11: #{tpu_custom_call.1} parent=5 // pred_region
        %s208 = ssub.s32 %s16, 1
        // Predicated region
        $region13: #{tpu_custom_call.1} parent=11 // pred_check
          %p209 = pneg %p63
        $region14: #{tpu_custom_call.1} parent=11 // pred_check_branch
          %211 = sbr.rel (%p209) target = $region16
        $region15: #{tpu_custom_call.1} parent=11 // pred_region
          _
        $region16: #{tpu_custom_call.1} parent=11 // pred_fallthru
          _
        // Predicated region
        $region17: #{tpu_custom_call.1} parent=11 // pred_check
          %p212 = pneg %p84
        $region18: #{tpu_custom_call.1} parent=11 // pred_check_branch
          %214 = sbr.rel (%p212) target = $region20
        $region19: #{tpu_custom_call.1} parent=11 // pred_region
          _
        $region20: #{tpu_custom_call.1} parent=11 // pred_fallthru
          _
        // Predicated region
        $region21: #{tpu_custom_call.1} parent=11 // pred_check
          %p215 = pneg %p105
        $region22: #{tpu_custom_call.1} parent=11 // pred_check_branch
          %217 = sbr.rel (%p215) target = $region24
        $region23: #{tpu_custom_call.1} parent=11 // pred_region
          _
        $region24: #{tpu_custom_call.1} parent=11 // pred_fallthru
          _
        // Predicated region
        $region25: #{tpu_custom_call.1} parent=11 // pred_check
          %p218 = pneg %p126
        $region26: #{tpu_custom_call.1} parent=11 // pred_check_branch
          %220 = sbr.rel (%p218) target = $region28
        $region27: #{tpu_custom_call.1} parent=11 // pred_region
          _
        $region28: #{tpu_custom_call.1} parent=11 // pred_fallthru
          _
        // Predicated region
        $region29: #{tpu_custom_call.1} parent=11 // pred_check
          %p221 = pneg %p147
        $region30: #{tpu_custom_call.1} parent=11 // pred_check_branch
          %223 = sbr.rel (%p221) target = $region32
        $region31: #{tpu_custom_call.1} parent=11 // pred_region
          _
        $region32: #{tpu_custom_call.1} parent=11 // pred_fallthru
          _
        // Predicated region
        $region33: #{tpu_custom_call.1} parent=11 // pred_check
          %p224 = pneg %p168
        $region34: #{tpu_custom_call.1} parent=11 // pred_check_branch
          %226 = sbr.rel (%p224) target = $region36
        $region35: #{tpu_custom_call.1} parent=11 // pred_region
          _
        $region36: #{tpu_custom_call.1} parent=11 // pred_fallthru
          _
      $region12: #{tpu_custom_call.1} parent=5 // pred_fallthru
        _
      %p227 = scmp.lt.s32.totalorder %s16, 4
      // Predicated region
      $region37: #{tpu_custom_call.1} parent=5 // pred_check
        %p228 = pneg %p227
      $region38: #{tpu_custom_call.1} parent=5 // pred_check_branch
        %230 = sbr.rel (%p228) target = $region40
      $region39: #{tpu_custom_call.1} parent=5 // pred_region
        // Predicated region
        $region41: #{tpu_custom_call.1} parent=39 // pred_check
          %p231 = pneg %p36
        $region42: #{tpu_custom_call.1} parent=39 // pred_check_branch
          %233 = sbr.rel (%p231) target = $region44
        $region43: #{tpu_custom_call.1} parent=39 // pred_region
          %s234 = smul.u32 16, %s16
          %p235 = scmp.lt.s32.totalorder %s234, 63
          %s236 = scalar_select %p235, %s234, 63
          %s237 = smul.addr %s236, 7
          %s238 = smul.addr %s237, 8
          %s239 = scalar_lea.vmem %s0, %s238
          %s240 = smul.u32 16, %s16
        $region44: #{tpu_custom_call.1} parent=39 // pred_fallthru
          _
      $region40: #{tpu_custom_call.1} parent=5 // pred_fallthru
        _
      %p241 = scmp.le.s32.totalorder 1, %s16
      %p242 = scmp.lt.s32.totalorder %s16, 5
      %p243 = pnand %p241, %p242
      %p244 = pneg %p243
      // Predicated region
      $region45: #{tpu_custom_call.1} parent=5 // pred_check
        _
      $region46: #{tpu_custom_call.1} parent=5 // pred_check_branch
        %246 = sbr.rel (%p243) target = $region48
      $region47: #{tpu_custom_call.1} parent=5 // pred_region
        %s247 = ssub.s32 %s16, 1
        %s248 = smul.u32 16, %s21
        %p249 = scmp.lt.s32.totalorder %s248, 63
        %s250 = scalar_select %p249, %s248, 63
        %s251 = smul.addr %s250, 7
        %s252 = smul.addr %s251, 8
        %s253 = scalar_lea.vmem %s0, %s252
        %p254 = pneg %p42
        %p255 = pneg %p39
        %p256 = pneg %p63
        %p257 = pneg %p60
        %p258 = pneg %p84
        %p259 = pneg %p81
        %p260 = pneg %p105
        %p261 = pneg %p102
        %p262 = pneg %p126
        %p263 = pneg %p123
        %p264 = pneg %p147
        %p265 = pneg %p144
        %p266 = pneg %p168
        %p267 = pneg %p165
        %p268 = pneg %p194
        %p269 = pneg %p191
        %s270 = sand.u32 %s181, 1
        %s271 = scalar_lea.sflag [#allocation3], %s270
        %s272 = sand.u32 %s181, 1
        %s273 = smul.addr %s272, 64
        %s274 = scalar_lea.vmem [#allocation2], %s273
        %s275 = smul.u32 16, %s21
        %p276 = scmp.lt.s32.totalorder %s275, 63
        %s277 = scalar_select %p276, %s275, 63
        %s278 = smul.addr %s277, 7
        %s279 = smul.addr %s278, 8
        %s280 = scalar_lea.vmem %s0, %s279
        %s281 = smul.u32 16, %s21
        %s282 = smul.u32 16, %s21
        %v284 = vld [vmem:[%s280] sm:$0xff]
        %v285 = vld [vmem:[%s280 + $0x8] sm:$0xff]
        %v286 = vld [vmem:[%s280 + $0x10] sm:$0xff]
        %v287 = vld [vmem:[%s280 + $0x18] sm:$0xff]
        %v288 = vld [vmem:[%s280 + $0x20] sm:$0xff]
        %v289 = vld [vmem:[%s280 + $0x28] sm:$0xff]
        %v290 = vld [vmem:[%s280 + $0x30] sm:$0xff]
        %v291 = vld [vmem:[%s280 + $0x38] sm:$0xff]
        %v292 = vld [vmem:[%s280 + $0x40] sm:$0xff]
        %v293 = vld [vmem:[%s280 + $0x48] sm:$0xff]
        %v294 = vld [vmem:[%s280 + $0x50] sm:$0xff]
        %v295 = vld [vmem:[%s280 + $0x58] sm:$0xff]
        %v296 = vld [vmem:[%s280 + $0x60] sm:$0xff]
        %v297 = vld [vmem:[%s280 + $0x68] sm:$0xff]
        %v298 = vld [vmem:[%s280 + $0x70] sm:$0xff]
        %v299 = vld [vmem:[%s280 + $0x78] sm:$0xff]
        %v300 = vld [vmem:[%s280 + $0x80] sm:$0xff]
        %v301 = vld [vmem:[%s280 + $0x88] sm:$0xff]
        %v302 = vld [vmem:[%s280 + $0x90] sm:$0xff]
        %v303 = vld [vmem:[%s280 + $0x98] sm:$0xff]
        %v304 = vld [vmem:[%s280 + $0xa0] sm:$0xff]
        %v305 = vld [vmem:[%s280 + $0xa8] sm:$0xff]
        %v306 = vld [vmem:[%s280 + $0xb0] sm:$0xff]
        %v307 = vld [vmem:[%s280 + $0xb8] sm:$0xff]
        %v308 = vld [vmem:[%s280 + $0xc0] sm:$0xff]
        %v309 = vld [vmem:[%s280 + $0xc8] sm:$0xff]
        %v310 = vld [vmem:[%s280 + $0xd0] sm:$0xff]
        %v311 = vld [vmem:[%s280 + $0xd8] sm:$0xff]
        %v312 = vld [vmem:[%s280 + $0xe0] sm:$0xff]
        %v313 = vld [vmem:[%s280 + $0xe8] sm:$0xff]
        %v314 = vld [vmem:[%s280 + $0xf0] sm:$0xff]
        %v315 = vld [vmem:[%s280 + $0xf8] sm:$0xff]
        %v316 = vld [vmem:[%s280 + $0x100] sm:$0xff]
        %v317 = vld [vmem:[%s280 + $0x108] sm:$0xff]
        %v318 = vld [vmem:[%s280 + $0x110] sm:$0xff]
        %v319 = vld [vmem:[%s280 + $0x118] sm:$0xff]
        %v320 = vld [vmem:[%s280 + $0x120] sm:$0xff]
        %v321 = vld [vmem:[%s280 + $0x128] sm:$0xff]
        %v322 = vld [vmem:[%s280 + $0x130] sm:$0xff]
        %v323 = vld [vmem:[%s280 + $0x138] sm:$0xff]
        %v324 = vld [vmem:[%s280 + $0x140] sm:$0xff]
        %v325 = vld [vmem:[%s280 + $0x148] sm:$0xff]
        %v326 = vld [vmem:[%s280 + $0x150] sm:$0xff]
        %v327 = vld [vmem:[%s280 + $0x158] sm:$0xff]
        %v328 = vld [vmem:[%s280 + $0x160] sm:$0xff]
        %v329 = vld [vmem:[%s280 + $0x168] sm:$0xff]
        %v330 = vld [vmem:[%s280 + $0x170] sm:$0xff]
        %v331 = vld [vmem:[%s280 + $0x178] sm:$0xff]
        %v332 = vld [vmem:[%s280 + $0x180] sm:$0xff]
        %v333 = vld [vmem:[%s280 + $0x188] sm:$0xff]
        %v334 = vld [vmem:[%s280 + $0x190] sm:$0xff]
        %v335 = vld [vmem:[%s280 + $0x198] sm:$0xff]
        %v336 = vld [vmem:[%s280 + $0x1a0] sm:$0xff]
        %v337 = vld [vmem:[%s280 + $0x1a8] sm:$0xff]
        %v338 = vld [vmem:[%s280 + $0x1b0] sm:$0xff]
        %v339 = vld [vmem:[%s280 + $0x1b8] sm:$0xff]
        %v340 = vld [vmem:[%s280 + $0x1c0] sm:$0xff]
        %v341 = vld [vmem:[%s280 + $0x1c8] sm:$0xff]
        %v342 = vld [vmem:[%s280 + $0x1d0] sm:$0xff]
        %v343 = vld [vmem:[%s280 + $0x1d8] sm:$0xff]
        %v344 = vld [vmem:[%s280 + $0x1e0] sm:$0xff]
        %v345 = vld [vmem:[%s280 + $0x1e8] sm:$0xff]
        %v346 = vld [vmem:[%s280 + $0x1f0] sm:$0xff]
        %v347 = vld [vmem:[%s280 + $0x1f8] sm:$0xff]
        %v348 = vld [vmem:[%s280 + $0x200] sm:$0xff]
        %v349 = vld [vmem:[%s280 + $0x208] sm:$0xff]
        %v350 = vld [vmem:[%s280 + $0x210] sm:$0xff]
        %v351 = vld [vmem:[%s280 + $0x218] sm:$0xff]
        %v352 = vld [vmem:[%s280 + $0x220] sm:$0xff]
        %v353 = vld [vmem:[%s280 + $0x228] sm:$0xff]
        %v354 = vld [vmem:[%s280 + $0x230] sm:$0xff]
        %v355 = vld [vmem:[%s280 + $0x238] sm:$0xff]
        %v356 = vld [vmem:[%s280 + $0x240] sm:$0xff]
        %v357 = vld [vmem:[%s280 + $0x248] sm:$0xff]
        %v358 = vld [vmem:[%s280 + $0x250] sm:$0xff]
        %v359 = vld [vmem:[%s280 + $0x258] sm:$0xff]
        %v360 = vld [vmem:[%s280 + $0x260] sm:$0xff]
        %v361 = vld [vmem:[%s280 + $0x268] sm:$0xff]
        %v362 = vld [vmem:[%s280 + $0x270] sm:$0xff]
        %v363 = vld [vmem:[%s280 + $0x278] sm:$0xff]
        %v364 = vld [vmem:[%s280 + $0x280] sm:$0xff]
        %v365 = vld [vmem:[%s280 + $0x288] sm:$0xff]
        %v366 = vld [vmem:[%s280 + $0x290] sm:$0xff]
        %v367 = vld [vmem:[%s280 + $0x298] sm:$0xff]
        %v368 = vld [vmem:[%s280 + $0x2a0] sm:$0xff]
        %v369 = vld [vmem:[%s280 + $0x2a8] sm:$0xff]
        %v370 = vld [vmem:[%s280 + $0x2b0] sm:$0xff]
        %v371 = vld [vmem:[%s280 + $0x2b8] sm:$0xff]
        %v372 = vld [vmem:[%s280 + $0x2c0] sm:$0xff]
        %v373 = vld [vmem:[%s280 + $0x2c8] sm:$0xff]
        %v374 = vld [vmem:[%s280 + $0x2d0] sm:$0xff]
        %v375 = vld [vmem:[%s280 + $0x2d8] sm:$0xff]
        %v376 = vld [vmem:[%s280 + $0x2e0] sm:$0xff]
        %v377 = vld [vmem:[%s280 + $0x2e8] sm:$0xff]
        %v378 = vld [vmem:[%s280 + $0x2f0] sm:$0xff]
        %v379 = vld [vmem:[%s280 + $0x2f8] sm:$0xff]
        %v380 = vld [vmem:[%s280 + $0x300] sm:$0xff]
        %v381 = vld [vmem:[%s280 + $0x308] sm:$0xff]
        %v382 = vld [vmem:[%s280 + $0x310] sm:$0xff]
        %v383 = vld [vmem:[%s280 + $0x318] sm:$0xff]
        %v384 = vld [vmem:[%s280 + $0x320] sm:$0xff]
        %v385 = vld [vmem:[%s280 + $0x328] sm:$0xff]
        %v386 = vld [vmem:[%s280 + $0x330] sm:$0xff]
        %v387 = vld [vmem:[%s280 + $0x338] sm:$0xff]
        %v388 = vld [vmem:[%s280 + $0x340] sm:$0xff]
        %v389 = vld [vmem:[%s280 + $0x348] sm:$0xff]
        %v390 = vld [vmem:[%s280 + $0x350] sm:$0xff]
        %v391 = vld [vmem:[%s280 + $0x358] sm:$0xff]
        %v392 = vld [vmem:[%s280 + $0x360] sm:$0xff]
        %v393 = vld [vmem:[%s280 + $0x368] sm:$0xff]
        %v394 = vld [vmem:[%s280 + $0x370] sm:$0xff]
        %v395 = vld [vmem:[%s280 + $0x378] sm:$0xff]
        %v396 = vpack.c.bf16 %v291, %v284
        %v397 = vpack.c.bf16 %v292, %v285
        %v398 = vpack.c.bf16 %v293, %v286
        %v399 = vpack.c.bf16 %v294, %v287
        %v400 = vpack.c.bf16 %v295, %v288
        %v401 = vpack.c.bf16 %v296, %v289
        %v402 = vpack.c.bf16 %v297, %v290
        %v403 = vpack.c.bf16 %v305, %v298
        %v404 = vpack.c.bf16 %v306, %v299
        %v405 = vpack.c.bf16 %v307, %v300
        %v406 = vpack.c.bf16 %v308, %v301
        %v407 = vpack.c.bf16 %v309, %v302
        %v408 = vpack.c.bf16 %v310, %v303
        %v409 = vpack.c.bf16 %v311, %v304
        %v410 = vpack.c.bf16 %v319, %v312
        %v411 = vpack.c.bf16 %v320, %v313
        %v412 = vpack.c.bf16 %v321, %v314
        %v413 = vpack.c.bf16 %v322, %v315
        %v414 = vpack.c.bf16 %v323, %v316
        %v415 = vpack.c.bf16 %v324, %v317
        %v416 = vpack.c.bf16 %v325, %v318
        %v417 = vpack.c.bf16 %v333, %v326
        %v418 = vpack.c.bf16 %v334, %v327
        %v419 = vpack.c.bf16 %v335, %v328
        %v420 = vpack.c.bf16 %v336, %v329
        %v421 = vpack.c.bf16 %v337, %v330
        %v422 = vpack.c.bf16 %v338, %v331
        %v423 = vpack.c.bf16 %v339, %v332
        %v424 = vpack.c.bf16 %v347, %v340
        %v425 = vpack.c.bf16 %v348, %v341
        %v426 = vpack.c.bf16 %v349, %v342
        %v427 = vpack.c.bf16 %v350, %v343
        %v428 = vpack.c.bf16 %v351, %v344
        %v429 = vpack.c.bf16 %v352, %v345
        %v430 = vpack.c.bf16 %v353, %v346
        %v431 = vpack.c.bf16 %v361, %v354
        %v432 = vpack.c.bf16 %v362, %v355
        %v433 = vpack.c.bf16 %v363, %v356
        %v434 = vpack.c.bf16 %v364, %v357
        %v435 = vpack.c.bf16 %v365, %v358
        %v436 = vpack.c.bf16 %v366, %v359
        %v437 = vpack.c.bf16 %v367, %v360
        %v438 = vpack.c.bf16 %v375, %v368
        %v439 = vpack.c.bf16 %v376, %v369
        %v440 = vpack.c.bf16 %v377, %v370
        %v441 = vpack.c.bf16 %v378, %v371
        %v442 = vpack.c.bf16 %v379, %v372
        %v443 = vpack.c.bf16 %v380, %v373
        %v444 = vpack.c.bf16 %v381, %v374
        %v445 = vpack.c.bf16 %v389, %v382
        %v446 = vpack.c.bf16 %v390, %v383
        %v447 = vpack.c.bf16 %v391, %v384
        %v448 = vpack.c.bf16 %v392, %v385
        %v449 = vpack.c.bf16 %v393, %v386
        %v450 = vpack.c.bf16 %v394, %v387
        %v451 = vpack.c.bf16 %v395, %v388
        %v452 = vld [vmem:[%s1] sm:$0xff]
        %v453 = vld [vmem:[%s1 + $0x8] sm:$0xff]
        %v454 = vld [vmem:[%s1 + $0x10] sm:$0xff]
        %v455 = vld [vmem:[%s1 + $0x18] sm:$0xff]
        %v456 = vld [vmem:[%s1 + $0x20] sm:$0xff]
        %v457 = vld [vmem:[%s1 + $0x28] sm:$0xff]
        %v458 = vld [vmem:[%s1 + $0x30] sm:$0xff]
        %v459 = vld [vmem:[%s1 + $0x38] sm:$0xff]
        %v460 = vld [vmem:[%s1 + $0x40] sm:$0xff]
        %v461 = vld [vmem:[%s1 + $0x48] sm:$0xff]
        %v462 = vld [vmem:[%s1 + $0x50] sm:$0xff]
        %v463 = vld [vmem:[%s1 + $0x58] sm:$0xff]
        %v464 = vld [vmem:[%s1 + $0x60] sm:$0xff]
        %v465 = vld [vmem:[%s1 + $0x68] sm:$0xff]
        %v466 = vld [vmem:[%s1 + $0x70] sm:$0xff]
        %v467 = vld [vmem:[%s1 + $0x78] sm:$0xff]
        %v468 = vld [vmem:[%s1 + $0x80] sm:$0xff]
        %v469 = vld [vmem:[%s1 + $0x88] sm:$0xff]
        %v470 = vld [vmem:[%s1 + $0x90] sm:$0xff]
        %v471 = vld [vmem:[%s1 + $0x98] sm:$0xff]
        %v472 = vld [vmem:[%s1 + $0xa0] sm:$0xff]
        %v473 = vld [vmem:[%s1 + $0xa8] sm:$0xff]
        %v474 = vld [vmem:[%s1 + $0xb0] sm:$0xff]
        %v475 = vld [vmem:[%s1 + $0xb8] sm:$0xff]
        %v476 = vld [vmem:[%s1 + $0xc0] sm:$0xff]
        %v477 = vld [vmem:[%s1 + $0xc8] sm:$0xff]
        %v478 = vld [vmem:[%s1 + $0xd0] sm:$0xff]
        %v479 = vld [vmem:[%s1 + $0xd8] sm:$0xff]
        %v480 = vld [vmem:[%s1 + $0xe0] sm:$0xff]
        %v481 = vld [vmem:[%s1 + $0xe8] sm:$0xff]
        %v482 = vld [vmem:[%s1 + $0xf0] sm:$0xff]
        %v483 = vld [vmem:[%s1 + $0xf8] sm:$0xff]
        %v484 = vld [vmem:[%s1 + $0x100] sm:$0xff]
        %v485 = vld [vmem:[%s1 + $0x108] sm:$0xff]
        %v486 = vld [vmem:[%s1 + $0x110] sm:$0xff]
        %v487 = vld [vmem:[%s1 + $0x118] sm:$0xff]
        %v488 = vld [vmem:[%s1 + $0x120] sm:$0xff]
        %v489 = vld [vmem:[%s1 + $0x128] sm:$0xff]
        %v490 = vld [vmem:[%s1 + $0x130] sm:$0xff]
        %v491 = vld [vmem:[%s1 + $0x138] sm:$0xff]
        %v492 = vld [vmem:[%s1 + $0x140] sm:$0xff]
        %v493 = vld [vmem:[%s1 + $0x148] sm:$0xff]
        %v494 = vld [vmem:[%s1 + $0x150] sm:$0xff]
        %v495 = vld [vmem:[%s1 + $0x158] sm:$0xff]
        %v496 = vld [vmem:[%s1 + $0x160] sm:$0xff]
        %v497 = vld [vmem:[%s1 + $0x168] sm:$0xff]
        %v498 = vld [vmem:[%s1 + $0x170] sm:$0xff]
        %v499 = vld [vmem:[%s1 + $0x178] sm:$0xff]
        %v500 = vld [vmem:[%s1 + $0x180] sm:$0xff]
        %v501 = vld [vmem:[%s1 + $0x188] sm:$0xff]
        %v502 = vld [vmem:[%s1 + $0x190] sm:$0xff]
        %v503 = vld [vmem:[%s1 + $0x198] sm:$0xff]
        %v504 = vld [vmem:[%s1 + $0x1a0] sm:$0xff]
        %v505 = vld [vmem:[%s1 + $0x1a8] sm:$0xff]
        %v506 = vld [vmem:[%s1 + $0x1b0] sm:$0xff]
        %v507 = vld [vmem:[%s1 + $0x1b8] sm:$0xff]
        %v508 = vld [vmem:[%s1 + $0x1c0] sm:$0xff]
        %v509 = vld [vmem:[%s1 + $0x1c8] sm:$0xff]
        %v510 = vld [vmem:[%s1 + $0x1d0] sm:$0xff]
        %v511 = vld [vmem:[%s1 + $0x1d8] sm:$0xff]
        %v512 = vld [vmem:[%s1 + $0x1e0] sm:$0xff]
        %v513 = vld [vmem:[%s1 + $0x1e8] sm:$0xff]
        %v514 = vld [vmem:[%s1 + $0x1f0] sm:$0xff]
        %v515 = vld [vmem:[%s1 + $0x1f8] sm:$0xff]
        %v516 = vld [vmem:[%s1 + $0x200] sm:$0xff]
        %v517 = vld [vmem:[%s1 + $0x208] sm:$0xff]
        %v518 = vld [vmem:[%s1 + $0x210] sm:$0xff]
        %v519 = vld [vmem:[%s1 + $0x218] sm:$0xff]
        %v520 = vld [vmem:[%s1 + $0x220] sm:$0xff]
        %v521 = vld [vmem:[%s1 + $0x228] sm:$0xff]
        %v522 = vld [vmem:[%s1 + $0x230] sm:$0xff]
        %v523 = vld [vmem:[%s1 + $0x238] sm:$0xff]
        %v524 = vld [vmem:[%s1 + $0x240] sm:$0xff]
        %v525 = vld [vmem:[%s1 + $0x248] sm:$0xff]
        %v526 = vld [vmem:[%s1 + $0x250] sm:$0xff]
        %v527 = vld [vmem:[%s1 + $0x258] sm:$0xff]
        %v528 = vld [vmem:[%s1 + $0x260] sm:$0xff]
        %v529 = vld [vmem:[%s1 + $0x268] sm:$0xff]
        %v530 = vld [vmem:[%s1 + $0x270] sm:$0xff]
        %v531 = vld [vmem:[%s1 + $0x278] sm:$0xff]
        %v532 = vld [vmem:[%s1 + $0x280] sm:$0xff]
        %v533 = vld [vmem:[%s1 + $0x288] sm:$0xff]
        %v534 = vld [vmem:[%s1 + $0x290] sm:$0xff]
        %v535 = vld [vmem:[%s1 + $0x298] sm:$0xff]
        %v536 = vld [vmem:[%s1 + $0x2a0] sm:$0xff]
        %v537 = vld [vmem:[%s1 + $0x2a8] sm:$0xff]
        %v538 = vld [vmem:[%s1 + $0x2b0] sm:$0xff]
        %v539 = vld [vmem:[%s1 + $0x2b8] sm:$0xff]
        %v540 = vld [vmem:[%s1 + $0x2c0] sm:$0xff]
        %v541 = vld [vmem:[%s1 + $0x2c8] sm:$0xff]
        %v542 = vld [vmem:[%s1 + $0x2d0] sm:$0xff]
        %v543 = vld [vmem:[%s1 + $0x2d8] sm:$0xff]
        %v544 = vld [vmem:[%s1 + $0x2e0] sm:$0xff]
        %v545 = vld [vmem:[%s1 + $0x2e8] sm:$0xff]
        %v546 = vld [vmem:[%s1 + $0x2f0] sm:$0xff]
        %v547 = vld [vmem:[%s1 + $0x2f8] sm:$0xff]
        %v548 = vld [vmem:[%s1 + $0x300] sm:$0xff]
        %v549 = vld [vmem:[%s1 + $0x308] sm:$0xff]
        %v550 = vld [vmem:[%s2] sm:$0x3]
        %v552 = vlaneseq
        %v553 = vshrl.u32 %v552, 7
        %v554 = vsub.s32 0, %v553
        %v555 = vrot.slane %v550, %v554
        %v556 = vlaneseq
        %v557 = vshrl.u32 %v556, 7
        %v558 = vsub.s32 1, %v557
        %v559 = vrot.slane %v550, %v558
        %v660 = vunpack.c.l.b16 %v452
        %v661 = vunpack.c.h.b16 %v452
        %v662 = vunpack.c.l.b16 %v453
        %v663 = vunpack.c.h.b16 %v453
        %v664 = vunpack.c.l.b16 %v454
        %v665 = vunpack.c.h.b16 %v454
        %v666 = vunpack.c.l.b16 %v455
        %v667 = vunpack.c.h.b16 %v455
        %v668 = vunpack.c.l.b16 %v456
        %v669 = vunpack.c.h.b16 %v456
        %v670 = vunpack.c.l.b16 %v457
        %v671 = vunpack.c.h.b16 %v457
        %v672 = vunpack.c.l.b16 %v458
        %v673 = vunpack.c.h.b16 %v458
        %v674 = vunpack.c.l.b16 %v459
        %v675 = vunpack.c.h.b16 %v459
        %v676 = vunpack.c.l.b16 %v460
        %v677 = vunpack.c.h.b16 %v460
        %v678 = vunpack.c.l.b16 %v461
        %v679 = vunpack.c.h.b16 %v461
        %v680 = vunpack.c.l.b16 %v462
        %v681 = vunpack.c.h.b16 %v462
        %v682 = vunpack.c.l.b16 %v463
        %v683 = vunpack.c.h.b16 %v463
        %v684 = vunpack.c.l.b16 %v464
        %v685 = vunpack.c.h.b16 %v464
        %v686 = vunpack.c.l.b16 %v465
        %v687 = vunpack.c.h.b16 %v465
        %v688 = vunpack.c.l.b16 %v466
        %v689 = vunpack.c.h.b16 %v466
        %v690 = vunpack.c.l.b16 %v467
        %v691 = vunpack.c.h.b16 %v467
        %v692 = vunpack.c.l.b16 %v468
        %v693 = vunpack.c.h.b16 %v468
        %v694 = vunpack.c.l.b16 %v469
        %v695 = vunpack.c.h.b16 %v469
        %v696 = vunpack.c.l.b16 %v470
        %v697 = vunpack.c.h.b16 %v470
        %v698 = vunpack.c.l.b16 %v471
        %v699 = vunpack.c.h.b16 %v471
        %v700 = vunpack.c.l.b16 %v472
        %v701 = vunpack.c.h.b16 %v472
        %v702 = vunpack.c.l.b16 %v473
        %v703 = vunpack.c.h.b16 %v473
        %v704 = vunpack.c.l.b16 %v474
        %v705 = vunpack.c.h.b16 %v474
        %v706 = vunpack.c.l.b16 %v475
        %v707 = vunpack.c.h.b16 %v475
        %v708 = vunpack.c.l.b16 %v476
        %v709 = vunpack.c.h.b16 %v476
        %v710 = vunpack.c.l.b16 %v477
        %v711 = vunpack.c.h.b16 %v477
        %v712 = vunpack.c.l.b16 %v478
        %v713 = vunpack.c.h.b16 %v478
        %v714 = vunpack.c.l.b16 %v479
        %v715 = vunpack.c.h.b16 %v479
        %v716 = vunpack.c.l.b16 %v480
        %v717 = vunpack.c.h.b16 %v480
        %v718 = vunpack.c.l.b16 %v481
        %v719 = vunpack.c.h.b16 %v481
        %v720 = vunpack.c.l.b16 %v482
        %v721 = vunpack.c.h.b16 %v482
        %v722 = vunpack.c.l.b16 %v483
        %v723 = vunpack.c.h.b16 %v483
        %v724 = vunpack.c.l.b16 %v484
        %v725 = vunpack.c.h.b16 %v484
        %v726 = vunpack.c.l.b16 %v485
        %v727 = vunpack.c.h.b16 %v485
        %v728 = vunpack.c.l.b16 %v486
        %v729 = vunpack.c.h.b16 %v486
        %v730 = vunpack.c.l.b16 %v487
        %v731 = vunpack.c.h.b16 %v487
        %v732 = vunpack.c.l.b16 %v488
        %v733 = vunpack.c.h.b16 %v488
        %v734 = vunpack.c.l.b16 %v489
        %v735 = vunpack.c.h.b16 %v489
        %v736 = vunpack.c.l.b16 %v490
        %v737 = vunpack.c.h.b16 %v490
        %v738 = vunpack.c.l.b16 %v491
        %v739 = vunpack.c.h.b16 %v491
        %v740 = vunpack.c.l.b16 %v492
        %v741 = vunpack.c.h.b16 %v492
        %v742 = vunpack.c.l.b16 %v493
        %v743 = vunpack.c.h.b16 %v493
        %v744 = vunpack.c.l.b16 %v494
        %v745 = vunpack.c.h.b16 %v494
        %v746 = vunpack.c.l.b16 %v495
        %v747 = vunpack.c.h.b16 %v495
        %v748 = vunpack.c.l.b16 %v496
        %v749 = vunpack.c.h.b16 %v496
        %v750 = vunpack.c.l.b16 %v497
        %v751 = vunpack.c.h.b16 %v497
        %v752 = vunpack.c.l.b16 %v498
        %v753 = vunpack.c.h.b16 %v498
        %v754 = vunpack.c.l.b16 %v499
        %v755 = vunpack.c.h.b16 %v499
        %v756 = vunpack.c.l.b16 %v500
        %v757 = vunpack.c.h.b16 %v500
        %v758 = vunpack.c.l.b16 %v501
        %v759 = vunpack.c.h.b16 %v501
        %v760 = vunpack.c.l.b16 %v502
        %v761 = vunpack.c.h.b16 %v502
        %v762 = vunpack.c.l.b16 %v503
        %v763 = vunpack.c.h.b16 %v503
        %v764 = vunpack.c.l.b16 %v504
        %v765 = vunpack.c.h.b16 %v504
        %v766 = vunpack.c.l.b16 %v505
        %v767 = vunpack.c.h.b16 %v505
        %v768 = vunpack.c.l.b16 %v506
        %v769 = vunpack.c.h.b16 %v506
        %v770 = vunpack.c.l.b16 %v507
        %v771 = vunpack.c.h.b16 %v507
        %v772 = vunpack.c.l.b16 %v508
        %v773 = vunpack.c.h.b16 %v508
        %v774 = vunpack.c.l.b16 %v509
        %v775 = vunpack.c.h.b16 %v509
        %v776 = vunpack.c.l.b16 %v510
        %v777 = vunpack.c.h.b16 %v510
        %v778 = vunpack.c.l.b16 %v511
        %v779 = vunpack.c.h.b16 %v511
        %v780 = vunpack.c.l.b16 %v512
        %v781 = vunpack.c.h.b16 %v512
        %v782 = vunpack.c.l.b16 %v513
        %v783 = vunpack.c.h.b16 %v513
        %v784 = vunpack.c.l.b16 %v514
        %v785 = vunpack.c.h.b16 %v514
        %v786 = vunpack.c.l.b16 %v515
        %v787 = vunpack.c.h.b16 %v515
        %v788 = vunpack.c.l.b16 %v516
        %v789 = vunpack.c.h.b16 %v516
        %v790 = vunpack.c.l.b16 %v517
        %v791 = vunpack.c.h.b16 %v517
        %v792 = vunpack.c.l.b16 %v518
        %v793 = vunpack.c.h.b16 %v518
        %v794 = vunpack.c.l.b16 %v519
        %v795 = vunpack.c.h.b16 %v519
        %v796 = vunpack.c.l.b16 %v520
        %v797 = vunpack.c.h.b16 %v520
        %v798 = vunpack.c.l.b16 %v521
        %v799 = vunpack.c.h.b16 %v521
        %v800 = vunpack.c.l.b16 %v522
        %v801 = vunpack.c.h.b16 %v522
        %v802 = vunpack.c.l.b16 %v523
        %v803 = vunpack.c.h.b16 %v523
        %v804 = vunpack.c.l.b16 %v524
        %v805 = vunpack.c.h.b16 %v524
        %v806 = vunpack.c.l.b16 %v525
        %v807 = vunpack.c.h.b16 %v525
        %v808 = vunpack.c.l.b16 %v526
        %v809 = vunpack.c.h.b16 %v526
        %v810 = vunpack.c.l.b16 %v527
        %v811 = vunpack.c.h.b16 %v527
        %v812 = vunpack.c.l.b16 %v528
        %v813 = vunpack.c.h.b16 %v528
        %v814 = vunpack.c.l.b16 %v529
        %v815 = vunpack.c.h.b16 %v529
        %v816 = vunpack.c.l.b16 %v530
        %v817 = vunpack.c.h.b16 %v530
        %v818 = vunpack.c.l.b16 %v531
        %v819 = vunpack.c.h.b16 %v531
        %v820 = vunpack.c.l.b16 %v532
        %v821 = vunpack.c.h.b16 %v532
        %v822 = vunpack.c.l.b16 %v533
        %v823 = vunpack.c.h.b16 %v533
        %v824 = vunpack.c.l.b16 %v534
        %v825 = vunpack.c.h.b16 %v534
        %v826 = vunpack.c.l.b16 %v535
        %v827 = vunpack.c.h.b16 %v535
        %v828 = vunpack.c.l.b16 %v536
        %v829 = vunpack.c.h.b16 %v536
        %v830 = vunpack.c.l.b16 %v537
        %v831 = vunpack.c.h.b16 %v537
        %v832 = vunpack.c.l.b16 %v538
        %v833 = vunpack.c.h.b16 %v538
        %v834 = vunpack.c.l.b16 %v539
        %v835 = vunpack.c.h.b16 %v539
        %v836 = vunpack.c.l.b16 %v540
        %v837 = vunpack.c.h.b16 %v540
        %v838 = vunpack.c.l.b16 %v541
        %v839 = vunpack.c.h.b16 %v541
        %v840 = vunpack.c.l.b16 %v542
        %v841 = vunpack.c.h.b16 %v542
        %v842 = vunpack.c.l.b16 %v543
        %v843 = vunpack.c.h.b16 %v543
        %v844 = vunpack.c.l.b16 %v544
        %v845 = vunpack.c.h.b16 %v544
        %v846 = vunpack.c.l.b16 %v545
        %v847 = vunpack.c.h.b16 %v545
        %v848 = vunpack.c.l.b16 %v546
        %v849 = vunpack.c.h.b16 %v546
        %v850 = vunpack.c.l.b16 %v547
        %v851 = vunpack.c.h.b16 %v547
        %v852 = vunpack.c.l.b16 %v548
        %v853 = vunpack.c.h.b16 %v548
        %v854 = vunpack.c.l.b16 %v549
        %v855 = vunpack.c.h.b16 %v549
        %v856 = vpack.c.b16 %v662, %v660
        %v857 = vpack.c.b16 %v663, %v661
        %v858 = vpack.c.b16 %v666, %v664
        %v859 = vpack.c.b16 %v667, %v665
        %v860 = vpack.c.b16 %v670, %v668
        %v861 = vpack.c.b16 %v671, %v669
        %v862 = vpack.c.b16 %v674, %v672
        %v863 = vpack.c.b16 %v675, %v673
        %v864 = vpack.c.b16 %v678, %v676
        %v865 = vpack.c.b16 %v679, %v677
        %v866 = vpack.c.b16 %v682, %v680
        %v867 = vpack.c.b16 %v683, %v681
        %v868 = vpack.c.b16 %v686, %v684
        %v869 = vpack.c.b16 %v687, %v685
        %v870 = vpack.c.b16 %v690, %v688
        %v871 = vpack.c.b16 %v691, %v689
        %v872 = vpack.c.b16 %v694, %v692
        %v873 = vpack.c.b16 %v695, %v693
        %v874 = vpack.c.b16 %v698, %v696
        %v875 = vpack.c.b16 %v699, %v697
        %v876 = vpack.c.b16 %v702, %v700
        %v877 = vpack.c.b16 %v703, %v701
        %v878 = vpack.c.b16 %v706, %v704
        %v879 = vpack.c.b16 %v707, %v705
        %v880 = vpack.c.b16 %v710, %v708
        %v881 = vpack.c.b16 %v711, %v709
        %v882 = vpack.c.b16 %v714, %v712
        %v883 = vpack.c.b16 %v715, %v713
        %v884 = vpack.c.b16 %v718, %v716
        %v885 = vpack.c.b16 %v719, %v717
        %v886 = vpack.c.b16 %v722, %v720
        %v887 = vpack.c.b16 %v723, %v721
        %v888 = vpack.c.b16 %v726, %v724
        %v889 = vpack.c.b16 %v727, %v725
        %v890 = vpack.c.b16 %v730, %v728
        %v891 = vpack.c.b16 %v731, %v729
        %v892 = vpack.c.b16 %v734, %v732
        %v893 = vpack.c.b16 %v735, %v733
        %v894 = vpack.c.b16 %v738, %v736
        %v895 = vpack.c.b16 %v739, %v737
        %v896 = vpack.c.b16 %v742, %v740
        %v897 = vpack.c.b16 %v743, %v741
        %v898 = vpack.c.b16 %v746, %v744
        %v899 = vpack.c.b16 %v747, %v745
        %v900 = vpack.c.b16 %v750, %v748
        %v901 = vpack.c.b16 %v751, %v749
        %v902 = vpack.c.b16 %v754, %v752
        %v903 = vpack.c.b16 %v755, %v753
        %v904 = vpack.c.b16 %v758, %v756
        %v905 = vpack.c.b16 %v759, %v757
        %v906 = vpack.c.b16 %v762, %v760
        %v907 = vpack.c.b16 %v763, %v761
        %v908 = vpack.c.b16 %v766, %v764
        %v909 = vpack.c.b16 %v767, %v765
        %v910 = vpack.c.b16 %v770, %v768
        %v911 = vpack.c.b16 %v771, %v769
        %v912 = vpack.c.b16 %v774, %v772
        %v913 = vpack.c.b16 %v775, %v773
        %v914 = vpack.c.b16 %v778, %v776
        %v915 = vpack.c.b16 %v779, %v777
        %v916 = vpack.c.b16 %v782, %v780
        %v917 = vpack.c.b16 %v783, %v781
        %v918 = vpack.c.b16 %v786, %v784
        %v919 = vpack.c.b16 %v787, %v785
        %v920 = vpack.c.b16 %v790, %v788
        %v921 = vpack.c.b16 %v791, %v789
        %v922 = vpack.c.b16 %v794, %v792
        %v923 = vpack.c.b16 %v795, %v793
        %v924 = vpack.c.b16 %v798, %v796
        %v925 = vpack.c.b16 %v799, %v797
        %v926 = vpack.c.b16 %v802, %v800
        %v927 = vpack.c.b16 %v803, %v801
        %v928 = vpack.c.b16 %v806, %v804
        %v929 = vpack.c.b16 %v807, %v805
        %v930 = vpack.c.b16 %v810, %v808
        %v931 = vpack.c.b16 %v811, %v809
        %v932 = vpack.c.b16 %v814, %v812
        %v933 = vpack.c.b16 %v815, %v813
        %v934 = vpack.c.b16 %v818, %v816
        %v935 = vpack.c.b16 %v819, %v817
        %v936 = vpack.c.b16 %v822, %v820
        %v937 = vpack.c.b16 %v823, %v821
        %v938 = vpack.c.b16 %v826, %v824
        %v939 = vpack.c.b16 %v827, %v825
        %v940 = vpack.c.b16 %v830, %v828
        %v941 = vpack.c.b16 %v831, %v829
        %v942 = vpack.c.b16 %v834, %v832
        %v943 = vpack.c.b16 %v835, %v833
        %v944 = vpack.c.b16 %v838, %v836
        %v945 = vpack.c.b16 %v839, %v837
        %v946 = vpack.c.b16 %v842, %v840
        %v947 = vpack.c.b16 %v843, %v841
        %v948 = vpack.c.b16 %v846, %v844
        %v949 = vpack.c.b16 %v847, %v845
        %v950 = vpack.c.b16 %v850, %v848
        %v951 = vpack.c.b16 %v851, %v849
        %v952 = vpack.c.b16 %v854, %v852
        %v953 = vpack.c.b16 %v855, %v853
        %vm1052 = vcmask 130048
        %v1054 = vsel %vm1052, %v402, 0
        %v1057 = vsel %vm1052, %v409, 0
        %v1060 = vsel %vm1052, %v416, 0
        %v1063 = vsel %vm1052, %v423, 0
        %v1066 = vsel %vm1052, %v430, 0
        %v1069 = vsel %vm1052, %v437, 0
        %v1072 = vsel %vm1052, %v444, 0
        %v1075 = vsel %vm1052, %v451, 0
        %1077 = vmatprep.subr.bf16.mxu0 %v857
        %1078 = vmatpush1.bf16.msra.mxu0 %v856
        %1079 = vmatprep.subr.bf16.mxu0 %v859
        %1080 = vmatpush1.bf16.msra.mxu0 %v858
        %1081 = vmatprep.subr.bf16.mxu0 %v861
        %1082 = vmatpush1.bf16.msra.mxu0 %v860
        %1083 = vmatprep.subr.bf16.mxu0 %v863
        %1084 = vmatpush1.bf16.msra.mxu0 %v862
        %1085 = vmatprep.subr.bf16.mxu0 %v865
        %1086 = vmatpush1.bf16.msra.mxu0 %v864
        %1087 = vmatprep.subr.bf16.mxu0 %v867
        %1088 = vmatpush1.bf16.msra.mxu0 %v866
        %1089 = vmatprep.subr.bf16.mxu0 %v869
        %1090 = vmatpush1.bf16.msra.mxu0 %v868
        %1091 = vmatprep.subr.bf16.mxu0 %v871
        %1092 = vmatpush1.bf16.msra.mxu0 %v870
        %1093 = vmatprep.subr.bf16.mxu0 %v873
        %1094 = vmatpush1.bf16.msra.mxu0 %v872
        %1095 = vmatprep.subr.bf16.mxu0 %v875
        %1096 = vmatpush1.bf16.msra.mxu0 %v874
        %1097 = vmatprep.subr.bf16.mxu0 %v877
        %1098 = vmatpush1.bf16.msra.mxu0 %v876
        %1099 = vmatprep.subr.bf16.mxu0 %v879
        %1100 = vmatpush1.bf16.msra.mxu0 %v878
        %1101 = vmatprep.subr.bf16.mxu0 %v881
        %1102 = vmatpush1.bf16.msra.mxu0 %v880
        %1103 = vmatprep.subr.bf16.mxu0 %v883
        %1104 = vmatpush1.bf16.msra.mxu0 %v882
        %1105 = vmatprep.subr.bf16.mxu0 %v885
        %1106 = vmatpush1.bf16.msra.mxu0 %v884
        %1107 = vmatprep.subr.bf16.mxu0 %v887
        %1108 = vmatpush1.bf16.msra.mxu0 %v886
        %1109 = vmatprep.mubr.bf16.mxu0 %v397
        %1110 = vmatmul.mubr.bf16.gmra.mrb[0].mxu0 %v396
        %v1111 = vpop.f32.mrb[0].mxu0
        %v1112 = vadd.f32 %v555, %v1111
        %v1113 = vpop.f32.mrb[0].mxu0
        %v1114 = vadd.f32 %v559, %v1113
        %v1115 = vpop.f32.mrb[0].mxu0
        %v1116 = vadd.f32 %v555, %v1115
        %v1117 = vpop.f32.mrb[0].mxu0
        %v1118 = vadd.f32 %v559, %v1117
        %1119 = vmatprep.mubr.bf16.mxu0 %v404
        %1120 = vmatmul.mubr.bf16.gmra.mrb[0].mxu0 %v403
        %v1121 = vpop.f32.mrb[0].mxu0
        %v1122 = vadd.f32 %v555, %v1121
        %v1123 = vpop.f32.mrb[0].mxu0
        %v1124 = vadd.f32 %v559, %v1123
        %v1125 = vpop.f32.mrb[0].mxu0
        %v1126 = vadd.f32 %v555, %v1125
        %v1127 = vpop.f32.mrb[0].mxu0
        %v1128 = vadd.f32 %v559, %v1127
        %1129 = vmatprep.mubr.bf16.mxu0 %v411
        %1130 = vmatmul.mubr.bf16.gmra.mrb[0].mxu0 %v410
        %v1131 = vpop.f32.mrb[0].mxu0
        %v1132 = vadd.f32 %v555, %v1131
        %v1133 = vpop.f32.mrb[0].mxu0
        %v1134 = vadd.f32 %v559, %v1133
        %v1135 = vpop.f32.mrb[0].mxu0
        %v1136 = vadd.f32 %v555, %v1135
        %v1137 = vpop.f32.mrb[0].mxu0
        %v1138 = vadd.f32 %v559, %v1137
        %1139 = vmatprep.mubr.bf16.mxu0 %v418
        %1140 = vmatmul.mubr.bf16.gmra.mrb[0].mxu0 %v417
        %v1141 = vpop.f32.mrb[0].mxu0
        %v1142 = vadd.f32 %v555, %v1141
        %v1143 = vpop.f32.mrb[0].mxu0
        %v1144 = vadd.f32 %v559, %v1143
        %v1145 = vpop.f32.mrb[0].mxu0
        %v1146 = vadd.f32 %v555, %v1145
        %v1147 = vpop.f32.mrb[0].mxu0
        %v1148 = vadd.f32 %v559, %v1147
        %1149 = vmatprep.mubr.bf16.mxu0 %v425
        %1150 = vmatmul.mubr.bf16.gmra.mrb[0].mxu0 %v424
        %v1151 = vpop.f32.mrb[0].mxu0
        %v1152 = vadd.f32 %v555, %v1151
        %v1153 = vpop.f32.mrb[0].mxu0
        %v1154 = vadd.f32 %v559, %v1153
        %v1155 = vpop.f32.mrb[0].mxu0
        %v1156 = vadd.f32 %v555, %v1155
        %v1157 = vpop.f32.mrb[0].mxu0
        %v1158 = vadd.f32 %v559, %v1157
        %1159 = vmatprep.mubr.bf16.mxu0 %v432
        %1160 = vmatmul.mubr.bf16.gmra.mrb[0].mxu0 %v431
        %v1161 = vpop.f32.mrb[0].mxu0
        %v1162 = vadd.f32 %v555, %v1161
        %v1163 = vpop.f32.mrb[0].mxu0
        %v1164 = vadd.f32 %v559, %v1163
        %v1165 = vpop.f32.mrb[0].mxu0
        %v1166 = vadd.f32 %v555, %v1165
        %v1167 = vpop.f32.mrb[0].mxu0
        %v1168 = vadd.f32 %v559, %v1167
        %1169 = vmatprep.mubr.bf16.mxu0 %v439
        %1170 = vmatmul.mubr.bf16.gmra.mrb[0].mxu0 %v438
        %v1171 = vpop.f32.mrb[0].mxu0
        %v1172 = vadd.f32 %v555, %v1171
        %v1173 = vpop.f32.mrb[0].mxu0
        %v1174 = vadd.f32 %v559, %v1173
        %v1175 = vpop.f32.mrb[0].mxu0
        %v1176 = vadd.f32 %v555, %v1175
        %v1177 = vpop.f32.mrb[0].mxu0
        %v1178 = vadd.f32 %v559, %v1177
        %1179 = vmatprep.mubr.bf16.mxu0 %v446
        %1180 = vmatmul.mubr.bf16.gmra.mrb[0].mxu0 %v445
        %v1181 = vpop.f32.mrb[0].mxu0
        %v1182 = vadd.f32 %v555, %v1181
        %v1183 = vpop.f32.mrb[0].mxu0
        %v1184 = vadd.f32 %v559, %v1183
        %v1185 = vpop.f32.mrb[0].mxu0
        %v1186 = vadd.f32 %v555, %v1185
        %v1187 = vpop.f32.mrb[0].mxu0
        %v1188 = vadd.f32 %v559, %v1187
        %1189 = vdwg.mxu0
        %1190 = vmatprep.subr.bf16.mxu0 %v889
        %1191 = vmatpush1.bf16.msra.mxu0 %v888
        %1192 = vmatprep.subr.bf16.mxu0 %v891
        %1193 = vmatpush1.bf16.msra.mxu0 %v890
        %1194 = vmatprep.subr.bf16.mxu0 %v893
        %1195 = vmatpush1.bf16.msra.mxu0 %v892
        %1196 = vmatprep.subr.bf16.mxu0 %v895
        %1197 = vmatpush1.bf16.msra.mxu0 %v894
        %1198 = vmatprep.subr.bf16.mxu0 %v897
        %1199 = vmatpush1.bf16.msra.mxu0 %v896
        %1200 = vmatprep.subr.bf16.mxu0 %v899
        %1201 = vmatpush1.bf16.msra.mxu0 %v898
        %1202 = vmatprep.subr.bf16.mxu0 %v901
        %1203 = vmatpush1.bf16.msra.mxu0 %v900
        %1204 = vmatprep.subr.bf16.mxu0 %v903
        %1205 = vmatpush1.bf16.msra.mxu0 %v902
        %1206 = vmatprep.subr.bf16.mxu0 %v905
        %1207 = vmatpush1.bf16.msra.mxu0 %v904
        %1208 = vmatprep.subr.bf16.mxu0 %v907
        %1209 = vmatpush1.bf16.msra.mxu0 %v906
        %1210 = vmatprep.subr.bf16.mxu0 %v909
        %1211 = vmatpush1.bf16.msra.mxu0 %v908
        %1212 = vmatprep.subr.bf16.mxu0 %v911
        %1213 = vmatpush1.bf16.msra.mxu0 %v910
        %1214 = vmatprep.subr.bf16.mxu0 %v913
        %1215 = vmatpush1.bf16.msra.mxu0 %v912
        %1216 = vmatprep.subr.bf16.mxu0 %v915
        %1217 = vmatpush1.bf16.msra.mxu0 %v914
        %1218 = vmatprep.subr.bf16.mxu0 %v917
        %1219 = vmatpush1.bf16.msra.mxu0 %v916
        %1220 = vmatprep.subr.bf16.mxu0 %v919
        %1221 = vmatpush1.bf16.msra.mxu0 %v918
        %1222 = vmatprep.mubr.bf16.mxu0 %v399
        %1223 = vmatmul.mubr.bf16.gmra.mrb[0].mxu0 %v398
        %v1224 = vpop.f32.mrb[0].mxu0
        %v1225 = vadd.f32 %v1112, %v1224
        %v1226 = vpop.f32.mrb[0].mxu0
        %v1227 = vadd.f32 %v1114, %v1226
        %v1228 = vpop.f32.mrb[0].mxu0
        %v1229 = vadd.f32 %v1116, %v1228
        %v1230 = vpop.f32.mrb[0].mxu0
        %v1231 = vadd.f32 %v1118, %v1230
        %1232 = vmatprep.mubr.bf16.mxu0 %v406
        %1233 = vmatmul.mubr.bf16.gmra.mrb[0].mxu0 %v405
        %v1234 = vpop.f32.mrb[0].mxu0
        %v1235 = vadd.f32 %v1122, %v1234
        %v1236 = vpop.f32.mrb[0].mxu0
        %v1237 = vadd.f32 %v1124, %v1236
        %v1238 = vpop.f32.mrb[0].mxu0
        %v1239 = vadd.f32 %v1126, %v1238
        %v1240 = vpop.f32.mrb[0].mxu0
        %v1241 = vadd.f32 %v1128, %v1240
        %1242 = vmatprep.mubr.bf16.mxu0 %v413
        %1243 = vmatmul.mubr.bf16.gmra.mrb[0].mxu0 %v412
        %v1244 = vpop.f32.mrb[0].mxu0
        %v1245 = vadd.f32 %v1132, %v1244
        %v1246 = vpop.f32.mrb[0].mxu0
        %v1247 = vadd.f32 %v1134, %v1246
        %v1248 = vpop.f32.mrb[0].mxu0
        %v1249 = vadd.f32 %v1136, %v1248
        %v1250 = vpop.f32.mrb[0].mxu0
        %v1251 = vadd.f32 %v1138, %v1250
        %1252 = vmatprep.mubr.bf16.mxu0 %v420
        %1253 = vmatmul.mubr.bf16.gmra.mrb[0].mxu0 %v419
        %v1254 = vpop.f32.mrb[0].mxu0
        %v1255 = vadd.f32 %v1142, %v1254
        %v1256 = vpop.f32.mrb[0].mxu0
        %v1257 = vadd.f32 %v1144, %v1256
        %v1258 = vpop.f32.mrb[0].mxu0
        %v1259 = vadd.f32 %v1146, %v1258
        %v1260 = vpop.f32.mrb[0].mxu0
        %v1261 = vadd.f32 %v1148, %v1260
        %1262 = vmatprep.mubr.bf16.mxu0 %v427
        %1263 = vmatmul.mubr.bf16.gmra.mrb[0].mxu0 %v426
        %v1264 = vpop.f32.mrb[0].mxu0
        %v1265 = vadd.f32 %v1152, %v1264
        %v1266 = vpop.f32.mrb[0].mxu0
        %v1267 = vadd.f32 %v1154, %v1266
        %v1268 = vpop.f32.mrb[0].mxu0
        %v1269 = vadd.f32 %v1156, %v1268
        %v1270 = vpop.f32.mrb[0].mxu0
        %v1271 = vadd.f32 %v1158, %v1270
        %1272 = vmatprep.mubr.bf16.mxu0 %v434
        %1273 = vmatmul.mubr.bf16.gmra.mrb[0].mxu0 %v433
        %v1274 = vpop.f32.mrb[0].mxu0
        %v1275 = vadd.f32 %v1162, %v1274
        %v1276 = vpop.f32.mrb[0].mxu0
        %v1277 = vadd.f32 %v1164, %v1276
        %v1278 = vpop.f32.mrb[0].mxu0
        %v1279 = vadd.f32 %v1166, %v1278
        %v1280 = vpop.f32.mrb[0].mxu0
        %v1281 = vadd.f32 %v1168, %v1280
        %1282 = vmatprep.mubr.bf16.mxu0 %v441
        %1283 = vmatmul.mubr.bf16.gmra.mrb[0].mxu0 %v440
        %v1284 = vpop.f32.mrb[0].mxu0
        %v1285 = vadd.f32 %v1172, %v1284
        %v1286 = vpop.f32.mrb[0].mxu0
        %v1287 = vadd.f32 %v1174, %v1286
        %v1288 = vpop.f32.mrb[0].mxu0
        %v1289 = vadd.f32 %v1176, %v1288
        %v1290 = vpop.f32.mrb[0].mxu0
        %v1291 = vadd.f32 %v1178, %v1290
        %1292 = vmatprep.mubr.bf16.mxu0 %v448
        %1293 = vmatmul.mubr.bf16.gmra.mrb[0].mxu0 %v447
        %v1294 = vpop.f32.mrb[0].mxu0
        %v1295 = vadd.f32 %v1182, %v1294
        %v1296 = vpop.f32.mrb[0].mxu0
        %v1297 = vadd.f32 %v1184, %v1296
        %v1298 = vpop.f32.mrb[0].mxu0
        %v1299 = vadd.f32 %v1186, %v1298
        %v1300 = vpop.f32.mrb[0].mxu0
        %v1301 = vadd.f32 %v1188, %v1300
        %1302 = vdwg.mxu0
        %1303 = vmatprep.subr.bf16.mxu0 %v921
        %1304 = vmatpush1.bf16.msra.mxu0 %v920
        %1305 = vmatprep.subr.bf16.mxu0 %v923
        %1306 = vmatpush1.bf16.msra.mxu0 %v922
        %1307 = vmatprep.subr.bf16.mxu0 %v925
        %1308 = vmatpush1.bf16.msra.mxu0 %v924
        %1309 = vmatprep.subr.bf16.mxu0 %v927
        %1310 = vmatpush1.bf16.msra.mxu0 %v926
        %1311 = vmatprep.subr.bf16.mxu0 %v929
        %1312 = vmatpush1.bf16.msra.mxu0 %v928
        %1313 = vmatprep.subr.bf16.mxu0 %v931
        %1314 = vmatpush1.bf16.msra.mxu0 %v930
        %1315 = vmatprep.subr.bf16.mxu0 %v933
        %1316 = vmatpush1.bf16.msra.mxu0 %v932
        %1317 = vmatprep.subr.bf16.mxu0 %v935
        %1318 = vmatpush1.bf16.msra.mxu0 %v934
        %1319 = vmatprep.subr.bf16.mxu0 %v937
        %1320 = vmatpush1.bf16.msra.mxu0 %v936
        %1321 = vmatprep.subr.bf16.mxu0 %v939
        %1322 = vmatpush1.bf16.msra.mxu0 %v938
        %1323 = vmatprep.subr.bf16.mxu0 %v941
        %1324 = vmatpush1.bf16.msra.mxu0 %v940
        %1325 = vmatprep.subr.bf16.mxu0 %v943
        %1326 = vmatpush1.bf16.msra.mxu0 %v942
        %1327 = vmatprep.subr.bf16.mxu0 %v945
        %1328 = vmatpush1.bf16.msra.mxu0 %v944
        %1329 = vmatprep.subr.bf16.mxu0 %v947
        %1330 = vmatpush1.bf16.msra.mxu0 %v946
        %1331 = vmatprep.subr.bf16.mxu0 %v949
        %1332 = vmatpush1.bf16.msra.mxu0 %v948
        %1333 = vmatprep.subr.bf16.mxu0 %v951
        %1334 = vmatpush1.bf16.msra.mxu0 %v950
        %1335 = vmatprep.mubr.bf16.mxu0 %v401
        %1336 = vmatmul.mubr.bf16.gmra.mrb[0].mxu0 %v400
        %v1337 = vpop.f32.mrb[0].mxu0
        %v1338 = vadd.f32 %v1225, %v1337
        %v1339 = vpop.f32.mrb[0].mxu0
        %v1340 = vadd.f32 %v1227, %v1339
        %v1341 = vpop.f32.mrb[0].mxu0
        %v1342 = vadd.f32 %v1229, %v1341
        %v1343 = vpop.f32.mrb[0].mxu0
        %v1344 = vadd.f32 %v1231, %v1343
        %1345 = vmatprep.mubr.bf16.mxu0 %v408
        %1346 = vmatmul.mubr.bf16.gmra.mrb[0].mxu0 %v407
        %v1347 = vpop.f32.mrb[0].mxu0
        %v1348 = vadd.f32 %v1235, %v1347
        %v1349 = vpop.f32.mrb[0].mxu0
        %v1350 = vadd.f32 %v1237, %v1349
        %v1351 = vpop.f32.mrb[0].mxu0
        %v1352 = vadd.f32 %v1239, %v1351
        %v1353 = vpop.f32.mrb[0].mxu0
        %v1354 = vadd.f32 %v1241, %v1353
        %1355 = vmatprep.mubr.bf16.mxu0 %v415
        %1356 = vmatmul.mubr.bf16.gmra.mrb[0].mxu0 %v414
        %v1357 = vpop.f32.mrb[0].mxu0
        %v1358 = vadd.f32 %v1245, %v1357
        %v1359 = vpop.f32.mrb[0].mxu0
        %v1360 = vadd.f32 %v1247, %v1359
        %v1361 = vpop.f32.mrb[0].mxu0
        %v1362 = vadd.f32 %v1249, %v1361
        %v1363 = vpop.f32.mrb[0].mxu0
        %v1364 = vadd.f32 %v1251, %v1363
        %1365 = vmatprep.mubr.bf16.mxu0 %v422
        %1366 = vmatmul.mubr.bf16.gmra.mrb[0].mxu0 %v421
        %v1367 = vpop.f32.mrb[0].mxu0
        %v1368 = vadd.f32 %v1255, %v1367
        %v1369 = vpop.f32.mrb[0].mxu0
        %v1370 = vadd.f32 %v1257, %v1369
        %v1371 = vpop.f32.mrb[0].mxu0
        %v1372 = vadd.f32 %v1259, %v1371
        %v1373 = vpop.f32.mrb[0].mxu0
        %v1374 = vadd.f32 %v1261, %v1373
        %1375 = vmatprep.mubr.bf16.mxu0 %v429
        %1376 = vmatmul.mubr.bf16.gmra.mrb[0].mxu0 %v428
        %v1377 = vpop.f32.mrb[0].mxu0
        %v1378 = vadd.f32 %v1265, %v1377
        %v1379 = vpop.f32.mrb[0].mxu0
        %v1380 = vadd.f32 %v1267, %v1379
        %v1381 = vpop.f32.mrb[0].mxu0
        %v1382 = vadd.f32 %v1269, %v1381
        %v1383 = vpop.f32.mrb[0].mxu0
        %v1384 = vadd.f32 %v1271, %v1383
        %1385 = vmatprep.mubr.bf16.mxu0 %v436
        %1386 = vmatmul.mubr.bf16.gmra.mrb[0].mxu0 %v435
        %v1387 = vpop.f32.mrb[0].mxu0
        %v1388 = vadd.f32 %v1275, %v1387
        %v1389 = vpop.f32.mrb[0].mxu0
        %v1390 = vadd.f32 %v1277, %v1389
        %v1391 = vpop.f32.mrb[0].mxu0
        %v1392 = vadd.f32 %v1279, %v1391
        %v1393 = vpop.f32.mrb[0].mxu0
        %v1394 = vadd.f32 %v1281, %v1393
        %1395 = vmatprep.mubr.bf16.mxu0 %v443
        %1396 = vmatmul.mubr.bf16.gmra.mrb[0].mxu0 %v442
        %v1397 = vpop.f32.mrb[0].mxu0
        %v1398 = vadd.f32 %v1285, %v1397
        %v1399 = vpop.f32.mrb[0].mxu0
        %v1400 = vadd.f32 %v1287, %v1399
        %v1401 = vpop.f32.mrb[0].mxu0
        %v1402 = vadd.f32 %v1289, %v1401
        %v1403 = vpop.f32.mrb[0].mxu0
        %v1404 = vadd.f32 %v1291, %v1403
        %1405 = vmatprep.mubr.bf16.mxu0 %v450
        %1406 = vmatmul.mubr.bf16.gmra.mrb[0].mxu0 %v449
        %v1407 = vpop.f32.mrb[0].mxu0
        %v1408 = vadd.f32 %v1295, %v1407
        %v1409 = vpop.f32.mrb[0].mxu0
        %v1410 = vadd.f32 %v1297, %v1409
        %v1411 = vpop.f32.mrb[0].mxu0
        %v1412 = vadd.f32 %v1299, %v1411
        %v1413 = vpop.f32.mrb[0].mxu0
        %v1414 = vadd.f32 %v1301, %v1413
        %1415 = vdwg.mxu0
        %1416 = vmatprep.subr.bf16.mxu0 %v953
        %1417 = vmatpush1.bf16.msra.mxu0 %v952
        %1418 = vmatprep.subr.bf16.mxu0 0
        %1419 = vmatpush1.bf16.msra.mxu0 0
        %1420 = vmatprep.subr.bf16.mxu0 0
        %1421 = vmatpush1.bf16.msra.mxu0 0
        %1422 = vmatprep.subr.bf16.mxu0 0
        %1423 = vmatpush1.bf16.msra.mxu0 0
        %1424 = vmatprep.subr.bf16.mxu0 0
        %1425 = vmatpush1.bf16.msra.mxu0 0
        %1426 = vmatprep.subr.bf16.mxu0 0
        %1427 = vmatpush1.bf16.msra.mxu0 0
        %1428 = vmatprep.subr.bf16.mxu0 0
        %1429 = vmatpush1.bf16.msra.mxu0 0
        %1430 = vmatprep.subr.bf16.mxu0 0
        %1431 = vmatpush1.bf16.msra.mxu0 0
        %1432 = vmatprep.subr.bf16.mxu0 0
        %1433 = vmatpush1.bf16.msra.mxu0 0
        %1434 = vmatprep.subr.bf16.mxu0 0
        %1435 = vmatpush1.bf16.msra.mxu0 0
        %1436 = vmatprep.subr.bf16.mxu0 0
        %1437 = vmatpush1.bf16.msra.mxu0 0
        %1438 = vmatprep.subr.bf16.mxu0 0
        %1439 = vmatpush1.bf16.msra.mxu0 0
        %1440 = vmatprep.subr.bf16.mxu0 0
        %1441 = vmatpush1.bf16.msra.mxu0 0
        %1442 = vmatprep.subr.bf16.mxu0 0
        %1443 = vmatpush1.bf16.msra.mxu0 0
        %1444 = vmatprep.subr.bf16.mxu0 0
        %1445 = vmatpush1.bf16.msra.mxu0 0
        %1446 = vmatprep.subr.bf16.mxu0 0
        %1447 = vmatpush1.bf16.msra.mxu0 0
        %1448 = vmatprep.mubr.bf16.mxu0 0
        %1449 = vmatmul.mubr.bf16.gmra.mrb[0].mxu0 %v1054
        %v1450 = vpop.f32.mrb[0].mxu0
        %v1451 = vadd.f32 %v1338, %v1450
        %v1452 = vpop.f32.mrb[0].mxu0
        %v1453 = vadd.f32 %v1340, %v1452
        %v1454 = vpop.f32.mrb[0].mxu0
        %v1455 = vadd.f32 %v1342, %v1454
        %v1456 = vpop.f32.mrb[0].mxu0
        %v1457 = vadd.f32 %v1344, %v1456
        %1458 = vmatprep.mubr.bf16.mxu0 0
        %1459 = vmatmul.mubr.bf16.gmra.mrb[0].mxu0 %v1057
        %v1460 = vpop.f32.mrb[0].mxu0
        %v1461 = vadd.f32 %v1348, %v1460
        %v1462 = vpop.f32.mrb[0].mxu0
        %v1463 = vadd.f32 %v1350, %v1462
        %v1464 = vpop.f32.mrb[0].mxu0
        %v1465 = vadd.f32 %v1352, %v1464
        %v1466 = vpop.f32.mrb[0].mxu0
        %v1467 = vadd.f32 %v1354, %v1466
        %1468 = vmatprep.mubr.bf16.mxu0 0
        %1469 = vmatmul.mubr.bf16.gmra.mrb[0].mxu0 %v1060
        %v1470 = vpop.f32.mrb[0].mxu0
        %v1471 = vadd.f32 %v1358, %v1470
        %v1472 = vpop.f32.mrb[0].mxu0
        %v1473 = vadd.f32 %v1360, %v1472
        %v1474 = vpop.f32.mrb[0].mxu0
        %v1475 = vadd.f32 %v1362, %v1474
        %v1476 = vpop.f32.mrb[0].mxu0
        %v1477 = vadd.f32 %v1364, %v1476
        %1478 = vmatprep.mubr.bf16.mxu0 0
        %1479 = vmatmul.mubr.bf16.gmra.mrb[0].mxu0 %v1063
        %v1480 = vpop.f32.mrb[0].mxu0
        %v1481 = vadd.f32 %v1368, %v1480
        %v1482 = vpop.f32.mrb[0].mxu0
        %v1483 = vadd.f32 %v1370, %v1482
        %v1484 = vpop.f32.mrb[0].mxu0
        %v1485 = vadd.f32 %v1372, %v1484
        %v1486 = vpop.f32.mrb[0].mxu0
        %v1487 = vadd.f32 %v1374, %v1486
        %1488 = vmatprep.mubr.bf16.mxu0 0
        %1489 = vmatmul.mubr.bf16.gmra.mrb[0].mxu0 %v1066
        %v1490 = vpop.f32.mrb[0].mxu0
        %v1491 = vadd.f32 %v1378, %v1490
        %v1492 = vpop.f32.mrb[0].mxu0
        %v1493 = vadd.f32 %v1380, %v1492
        %v1494 = vpop.f32.mrb[0].mxu0
        %v1495 = vadd.f32 %v1382, %v1494
        %v1496 = vpop.f32.mrb[0].mxu0
        %v1497 = vadd.f32 %v1384, %v1496
        %1498 = vmatprep.mubr.bf16.mxu0 0
        %1499 = vmatmul.mubr.bf16.gmra.mrb[0].mxu0 %v1069
        %v1500 = vpop.f32.mrb[0].mxu0
        %v1501 = vadd.f32 %v1388, %v1500
        %v1502 = vpop.f32.mrb[0].mxu0
        %v1503 = vadd.f32 %v1390, %v1502
        %v1504 = vpop.f32.mrb[0].mxu0
        %v1505 = vadd.f32 %v1392, %v1504
        %v1506 = vpop.f32.mrb[0].mxu0
        %v1507 = vadd.f32 %v1394, %v1506
        %1508 = vmatprep.mubr.bf16.mxu0 0
        %1509 = vmatmul.mubr.bf16.gmra.mrb[0].mxu0 %v1072
        %v1510 = vpop.f32.mrb[0].mxu0
        %v1511 = vadd.f32 %v1398, %v1510
        %v1512 = vpop.f32.mrb[0].mxu0
        %v1513 = vadd.f32 %v1400, %v1512
        %v1514 = vpop.f32.mrb[0].mxu0
        %v1515 = vadd.f32 %v1402, %v1514
        %v1516 = vpop.f32.mrb[0].mxu0
        %v1517 = vadd.f32 %v1404, %v1516
        %1518 = vmatprep.mubr.bf16.mxu0 0
        %1519 = vmatmul.mubr.bf16.gmra.mrb[0].mxu0 %v1075
        %v1520 = vpop.f32.mrb[0].mxu0
        %v1521 = vadd.f32 %v1408, %v1520
        %v1522 = vpop.f32.mrb[0].mxu0
        %v1523 = vadd.f32 %v1410, %v1522
        %v1524 = vpop.f32.mrb[0].mxu0
        %v1525 = vadd.f32 %v1412, %v1524
        %v1526 = vpop.f32.mrb[0].mxu0
        %v1527 = vadd.f32 %v1414, %v1526
        %1528 = vdwg.mxu0
        %v1529 = vsub.f32 0.0, %v1451
        %v1530 = vsub.f32 0.0, %v1453
        %v1531 = vsub.f32 0.0, %v1455
        %v1532 = vsub.f32 0.0, %v1457
        %v1533 = vsub.f32 0.0, %v1461
        %v1534 = vsub.f32 0.0, %v1463
        %v1535 = vsub.f32 0.0, %v1465
        %v1536 = vsub.f32 0.0, %v1467
        %v1537 = vsub.f32 0.0, %v1471
        %v1538 = vsub.f32 0.0, %v1473
        %v1539 = vsub.f32 0.0, %v1475
        %v1540 = vsub.f32 0.0, %v1477
        %v1541 = vsub.f32 0.0, %v1481
        %v1542 = vsub.f32 0.0, %v1483
        %v1543 = vsub.f32 0.0, %v1485
        %v1544 = vsub.f32 0.0, %v1487
        %v1545 = vsub.f32 0.0, %v1491
        %v1546 = vsub.f32 0.0, %v1493
        %v1547 = vsub.f32 0.0, %v1495
        %v1548 = vsub.f32 0.0, %v1497
        %v1549 = vsub.f32 0.0, %v1501
        %v1550 = vsub.f32 0.0, %v1503
        %v1551 = vsub.f32 0.0, %v1505
        %v1552 = vsub.f32 0.0, %v1507
        %v1553 = vsub.f32 0.0, %v1511
        %v1554 = vsub.f32 0.0, %v1513
        %v1555 = vsub.f32 0.0, %v1515
        %v1556 = vsub.f32 0.0, %v1517
        %v1557 = vsub.f32 0.0, %v1521
        %v1558 = vsub.f32 0.0, %v1523
        %v1559 = vsub.f32 0.0, %v1525
        %v1560 = vsub.f32 0.0, %v1527
        %v1561 = vmul.f32 %v1529, 1.442695
        %v1562 = vpow.pop %v1561
        %v1563 = vmul.f32 %v1530, 1.442695
        %v1564 = vpow.pop %v1563
        %v1565 = vmul.f32 %v1531, 1.442695
        %v1566 = vpow.pop %v1565
        %v1567 = vmul.f32 %v1532, 1.442695
        %v1568 = vpow.pop %v1567
        %v1569 = vmul.f32 %v1533, 1.442695
        %v1570 = vpow.pop %v1569
        %v1571 = vmul.f32 %v1534, 1.442695
        %v1572 = vpow.pop %v1571
        %v1573 = vmul.f32 %v1535, 1.442695
        %v1574 = vpow.pop %v1573
        %v1575 = vmul.f32 %v1536, 1.442695
        %v1576 = vpow.pop %v1575
        %v1577 = vmul.f32 %v1537, 1.442695
        %v1578 = vpow.pop %v1577
        %v1579 = vmul.f32 %v1538, 1.442695
        %v1580 = vpow.pop %v1579
        %v1581 = vmul.f32 %v1539, 1.442695
        %v1582 = vpow.pop %v1581
        %v1583 = vmul.f32 %v1540, 1.442695
        %v1584 = vpow.pop %v1583
        %v1585 = vmul.f32 %v1541, 1.442695
        %v1586 = vpow.pop %v1585
        %v1587 = vmul.f32 %v1542, 1.442695
        %v1588 = vpow.pop %v1587
        %v1589 = vmul.f32 %v1543, 1.442695
        %v1590 = vpow.pop %v1589
        %v1591 = vmul.f32 %v1544, 1.442695
        %v1592 = vpow.pop %v1591
        %v1593 = vmul.f32 %v1545, 1.442695
        %v1594 = vpow.pop %v1593
        %v1595 = vmul.f32 %v1546, 1.442695
        %v1596 = vpow.pop %v1595
        %v1597 = vmul.f32 %v1547, 1.442695
        %v1598 = vpow.pop %v1597
        %v1599 = vmul.f32 %v1548, 1.442695
        %v1600 = vpow.pop %v1599
        %v1601 = vmul.f32 %v1549, 1.442695
        %v1602 = vpow.pop %v1601
        %v1603 = vmul.f32 %v1550, 1.442695
        %v1604 = vpow.pop %v1603
        %v1605 = vmul.f32 %v1551, 1.442695
        %v1606 = vpow.pop %v1605
        %v1607 = vmul.f32 %v1552, 1.442695
        %v1608 = vpow.pop %v1607
        %v1609 = vmul.f32 %v1553, 1.442695
        %v1610 = vpow.pop %v1609
        %v1611 = vmul.f32 %v1554, 1.442695
        %v1612 = vpow.pop %v1611
        %v1613 = vmul.f32 %v1555, 1.442695
        %v1614 = vpow.pop %v1613
        %v1615 = vmul.f32 %v1556, 1.442695
        %v1616 = vpow.pop %v1615
        %v1617 = vmul.f32 %v1557, 1.442695
        %v1618 = vpow.pop %v1617
        %v1619 = vmul.f32 %v1558, 1.442695
        %v1620 = vpow.pop %v1619
        %v1621 = vmul.f32 %v1559, 1.442695
        %v1622 = vpow.pop %v1621
        %v1623 = vmul.f32 %v1560, 1.442695
        %v1624 = vpow.pop %v1623
        %v1625 = vadd.f32 %v1562, 1.0
        %v1626 = vadd.f32 %v1564, 1.0
        %v1627 = vadd.f32 %v1566, 1.0
        %v1628 = vadd.f32 %v1568, 1.0
        %v1629 = vadd.f32 %v1570, 1.0
        %v1630 = vadd.f32 %v1572, 1.0
        %v1631 = vadd.f32 %v1574, 1.0
        %v1632 = vadd.f32 %v1576, 1.0
        %v1633 = vadd.f32 %v1578, 1.0
        %v1634 = vadd.f32 %v1580, 1.0
        %v1635 = vadd.f32 %v1582, 1.0
        %v1636 = vadd.f32 %v1584, 1.0
        %v1637 = vadd.f32 %v1586, 1.0
        %v1638 = vadd.f32 %v1588, 1.0
        %v1639 = vadd.f32 %v1590, 1.0
        %v1640 = vadd.f32 %v1592, 1.0
        %v1641 = vadd.f32 %v1594, 1.0
        %v1642 = vadd.f32 %v1596, 1.0
        %v1643 = vadd.f32 %v1598, 1.0
        %v1644 = vadd.f32 %v1600, 1.0
        %v1645 = vadd.f32 %v1602, 1.0
        %v1646 = vadd.f32 %v1604, 1.0
        %v1647 = vadd.f32 %v1606, 1.0
        %v1648 = vadd.f32 %v1608, 1.0
        %v1649 = vadd.f32 %v1610, 1.0
        %v1650 = vadd.f32 %v1612, 1.0
        %v1651 = vadd.f32 %v1614, 1.0
        %v1652 = vadd.f32 %v1616, 1.0
        %v1653 = vadd.f32 %v1618, 1.0
        %v1654 = vadd.f32 %v1620, 1.0
        %v1655 = vadd.f32 %v1622, 1.0
        %v1656 = vadd.f32 %v1624, 1.0
        %v1657 = vrcp.pop %v1625
        %v1658 = vrcp.pop %v1626
        %v1659 = vrcp.pop %v1627
        %v1660 = vrcp.pop %v1628
        %v1661 = vrcp.pop %v1629
        %v1662 = vrcp.pop %v1630
        %v1663 = vrcp.pop %v1631
        %v1664 = vrcp.pop %v1632
        %v1665 = vrcp.pop %v1633
        %v1666 = vrcp.pop %v1634
        %v1667 = vrcp.pop %v1635
        %v1668 = vrcp.pop %v1636
        %v1669 = vrcp.pop %v1637
        %v1670 = vrcp.pop %v1638
        %v1671 = vrcp.pop %v1639
        %v1672 = vrcp.pop %v1640
        %v1673 = vrcp.pop %v1641
        %v1674 = vrcp.pop %v1642
        %v1675 = vrcp.pop %v1643
        %v1676 = vrcp.pop %v1644
        %v1677 = vrcp.pop %v1645
        %v1678 = vrcp.pop %v1646
        %v1679 = vrcp.pop %v1647
        %v1680 = vrcp.pop %v1648
        %v1681 = vrcp.pop %v1649
        %v1682 = vrcp.pop %v1650
        %v1683 = vrcp.pop %v1651
        %v1684 = vrcp.pop %v1652
        %v1685 = vrcp.pop %v1653
        %v1686 = vrcp.pop %v1654
        %v1687 = vrcp.pop %v1655
        %v1688 = vrcp.pop %v1656
        %v1689 = vpack.c.bf16 %v1659, %v1657
        %v1690 = vpack.c.bf16 %v1660, %v1658
        %v1691 = vpack.c.bf16 %v1663, %v1661
        %v1692 = vpack.c.bf16 %v1664, %v1662
        %v1693 = vpack.c.bf16 %v1667, %v1665
        %v1694 = vpack.c.bf16 %v1668, %v1666
        %v1695 = vpack.c.bf16 %v1671, %v1669
        %v1696 = vpack.c.bf16 %v1672, %v1670
        %v1697 = vpack.c.bf16 %v1675, %v1673
        %v1698 = vpack.c.bf16 %v1676, %v1674
        %v1699 = vpack.c.bf16 %v1679, %v1677
        %v1700 = vpack.c.bf16 %v1680, %v1678
        %v1701 = vpack.c.bf16 %v1683, %v1681
        %v1702 = vpack.c.bf16 %v1684, %v1682
        %v1703 = vpack.c.bf16 %v1687, %v1685
        %v1704 = vpack.c.bf16 %v1688, %v1686
        %v1705 = vld [vmem:[%s3] sm:$0xf]
        %v1706 = vld [vmem:[%s3 + $0x4] sm:$0xf]
        %v1707 = vld [vmem:[%s3 + $0x8] sm:$0xf]
        %v1708 = vld [vmem:[%s3 + $0xc] sm:$0xf]
        %v1709 = vld [vmem:[%s3 + $0x10] sm:$0xf]
        %v1710 = vld [vmem:[%s3 + $0x14] sm:$0xf]
        %v1711 = vld [vmem:[%s3 + $0x18] sm:$0xf]
        %v1712 = vld [vmem:[%s3 + $0x1c] sm:$0xf]
        %v1713 = vld [vmem:[%s3 + $0x20] sm:$0xf]
        %v1714 = vld [vmem:[%s3 + $0x24] sm:$0xf]
        %v1715 = vld [vmem:[%s3 + $0x28] sm:$0xf]
        %v1716 = vld [vmem:[%s3 + $0x2c] sm:$0xf]
        %v1717 = vld [vmem:[%s3 + $0x30] sm:$0xf]
        %v1718 = vld [vmem:[%s3 + $0x34] sm:$0xf]
        %v1719 = vld [vmem:[%s3 + $0x38] sm:$0xf]
        %v1720 = vld [vmem:[%s3 + $0x3c] sm:$0xf]
        %v1721 = vld [vmem:[%s3 + $0x40] sm:$0xf]
        %v1722 = vld [vmem:[%s3 + $0x44] sm:$0xf]
        %v1723 = vld [vmem:[%s3 + $0x48] sm:$0xf]
        %v1724 = vld [vmem:[%s3 + $0x4c] sm:$0xf]
        %v1725 = vld [vmem:[%s3 + $0x50] sm:$0xf]
        %v1726 = vld [vmem:[%s3 + $0x54] sm:$0xf]
        %v1727 = vld [vmem:[%s3 + $0x58] sm:$0xf]
        %v1728 = vld [vmem:[%s3 + $0x5c] sm:$0xf]
        %v1729 = vld [vmem:[%s3 + $0x60] sm:$0xf]
        %v1730 = vld [vmem:[%s3 + $0x64] sm:$0xf]
        %v1731 = vld [vmem:[%s3 + $0x68] sm:$0xf]
        %v1732 = vld [vmem:[%s3 + $0x6c] sm:$0xf]
        %v1733 = vld [vmem:[%s3 + $0x70] sm:$0xf]
        %v1734 = vld [vmem:[%s3 + $0x74] sm:$0xf]
        %v1735 = vld [vmem:[%s3 + $0x78] sm:$0xf]
        %v1736 = vld [vmem:[%s3 + $0x7c] sm:$0xf]
        %v1737 = vld [vmem:[%s4] sm:$0x1]
        %v1739 = vlaneseq
        %v1740 = vshrl.u32 %v1739, 7
        %v1741 = vsub.s32 0, %v1740
        %v1742 = vrot.slane %v1737, %v1741
        %v1776 = vunpack.c.l.b16 %v1705
        %v1777 = vunpack.c.l.b16 %v1706
        %v1778 = vunpack.c.l.b16 %v1707
        %v1779 = vunpack.c.l.b16 %v1708
        %v1780 = vunpack.c.l.b16 %v1709
        %v1781 = vunpack.c.l.b16 %v1710
        %v1782 = vunpack.c.l.b16 %v1711
        %v1783 = vunpack.c.l.b16 %v1712
        %v1784 = vunpack.c.l.b16 %v1713
        %v1785 = vunpack.c.l.b16 %v1714
        %v1786 = vunpack.c.l.b16 %v1715
        %v1787 = vunpack.c.l.b16 %v1716
        %v1788 = vunpack.c.l.b16 %v1717
        %v1789 = vunpack.c.l.b16 %v1718
        %v1790 = vunpack.c.l.b16 %v1719
        %v1791 = vunpack.c.l.b16 %v1720
        %v1792 = vunpack.c.l.b16 %v1721
        %v1793 = vunpack.c.l.b16 %v1722
        %v1794 = vunpack.c.l.b16 %v1723
        %v1795 = vunpack.c.l.b16 %v1724
        %v1796 = vunpack.c.l.b16 %v1725
        %v1797 = vunpack.c.l.b16 %v1726
        %v1798 = vunpack.c.l.b16 %v1727
        %v1799 = vunpack.c.l.b16 %v1728
        %v1800 = vunpack.c.l.b16 %v1729
        %v1801 = vunpack.c.l.b16 %v1730
        %v1802 = vunpack.c.l.b16 %v1731
        %v1803 = vunpack.c.l.b16 %v1732
        %v1804 = vunpack.c.l.b16 %v1733
        %v1805 = vunpack.c.l.b16 %v1734
        %v1806 = vunpack.c.l.b16 %v1735
        %v1807 = vunpack.c.l.b16 %v1736
        %v1808 = vpack.c.b16 %v1777, %v1776
        %v1809 = vpack.c.b16 %v1779, %v1778
        %v1810 = vpack.c.b16 %v1781, %v1780
        %v1811 = vpack.c.b16 %v1783, %v1782
        %v1812 = vpack.c.b16 %v1785, %v1784
        %v1813 = vpack.c.b16 %v1787, %v1786
        %v1814 = vpack.c.b16 %v1789, %v1788
        %v1815 = vpack.c.b16 %v1791, %v1790
        %v1816 = vpack.c.b16 %v1793, %v1792
        %v1817 = vpack.c.b16 %v1795, %v1794
        %v1818 = vpack.c.b16 %v1797, %v1796
        %v1819 = vpack.c.b16 %v1799, %v1798
        %v1820 = vpack.c.b16 %v1801, %v1800
        %v1821 = vpack.c.b16 %v1803, %v1802
        %v1822 = vpack.c.b16 %v1805, %v1804
        %v1823 = vpack.c.b16 %v1807, %v1806
        %1840 = vmatprep.subr.bf16.mxu0 0
        %1841 = vmatpush1.bf16.msra.mxu0 %v1808
        %1842 = vmatprep.subr.bf16.mxu0 0
        %1843 = vmatpush1.bf16.msra.mxu0 %v1809
        %1844 = vmatprep.subr.bf16.mxu0 0
        %1845 = vmatpush1.bf16.msra.mxu0 %v1810
        %1846 = vmatprep.subr.bf16.mxu0 0
        %1847 = vmatpush1.bf16.msra.mxu0 %v1811
        %1848 = vmatprep.subr.bf16.mxu0 0
        %1849 = vmatpush1.bf16.msra.mxu0 %v1812
        %1850 = vmatprep.subr.bf16.mxu0 0
        %1851 = vmatpush1.bf16.msra.mxu0 %v1813
        %1852 = vmatprep.subr.bf16.mxu0 0
        %1853 = vmatpush1.bf16.msra.mxu0 %v1814
        %1854 = vmatprep.subr.bf16.mxu0 0
        %1855 = vmatpush1.bf16.msra.mxu0 %v1815
        %1856 = vmatprep.subr.bf16.mxu0 0
        %1857 = vmatpush1.bf16.msra.mxu0 %v1816
        %1858 = vmatprep.subr.bf16.mxu0 0
        %1859 = vmatpush1.bf16.msra.mxu0 %v1817
        %1860 = vmatprep.subr.bf16.mxu0 0
        %1861 = vmatpush1.bf16.msra.mxu0 %v1818
        %1862 = vmatprep.subr.bf16.mxu0 0
        %1863 = vmatpush1.bf16.msra.mxu0 %v1819
        %1864 = vmatprep.subr.bf16.mxu0 0
        %1865 = vmatpush1.bf16.msra.mxu0 %v1820
        %1866 = vmatprep.subr.bf16.mxu0 0
        %1867 = vmatpush1.bf16.msra.mxu0 %v1821
        %1868 = vmatprep.subr.bf16.mxu0 0
        %1869 = vmatpush1.bf16.msra.mxu0 %v1822
        %1870 = vmatprep.subr.bf16.mxu0 0
        %1871 = vmatpush1.bf16.msra.mxu0 %v1823
        %1872 = vmatprep.mubr.bf16.mxu0 %v1690
        %1873 = vmatmul.mubr.bf16.gmra.mrb[0].mxu0 %v1689
        %v1874 = vpop.f32.mrb[0].mxu0
        %v1875 = vadd.f32 %v1742, %v1874
        %v1876 = vpop.f32.mrb[0].mxu0
        %v1877 = vpop.f32.mrb[0].mxu0
        %v1878 = vadd.f32 %v1742, %v1877
        %v1879 = vpop.f32.mrb[0].mxu0
        %1880 = vmatprep.mubr.bf16.mxu0 %v1692
        %1881 = vmatmul.mubr.bf16.gmra.mrb[0].mxu0 %v1691
        %v1882 = vpop.f32.mrb[0].mxu0
        %v1883 = vadd.f32 %v1742, %v1882
        %v1884 = vpop.f32.mrb[0].mxu0
        %v1885 = vpop.f32.mrb[0].mxu0
        %v1886 = vadd.f32 %v1742, %v1885
        %v1887 = vpop.f32.mrb[0].mxu0
        %1888 = vmatprep.mubr.bf16.mxu0 %v1694
        %1889 = vmatmul.mubr.bf16.gmra.mrb[0].mxu0 %v1693
        %v1890 = vpop.f32.mrb[0].mxu0
        %v1891 = vadd.f32 %v1742, %v1890
        %v1892 = vpop.f32.mrb[0].mxu0
        %v1893 = vpop.f32.mrb[0].mxu0
        %v1894 = vadd.f32 %v1742, %v1893
        %v1895 = vpop.f32.mrb[0].mxu0
        %1896 = vmatprep.mubr.bf16.mxu0 %v1696
        %1897 = vmatmul.mubr.bf16.gmra.mrb[0].mxu0 %v1695
        %v1898 = vpop.f32.mrb[0].mxu0
        %v1899 = vadd.f32 %v1742, %v1898
        %v1900 = vpop.f32.mrb[0].mxu0
        %v1901 = vpop.f32.mrb[0].mxu0
        %v1902 = vadd.f32 %v1742, %v1901
        %v1903 = vpop.f32.mrb[0].mxu0
        %1904 = vmatprep.mubr.bf16.mxu0 %v1698
        %1905 = vmatmul.mubr.bf16.gmra.mrb[0].mxu0 %v1697
        %v1906 = vpop.f32.mrb[0].mxu0
        %v1907 = vadd.f32 %v1742, %v1906
        %v1908 = vpop.f32.mrb[0].mxu0
        %v1909 = vpop.f32.mrb[0].mxu0
        %v1910 = vadd.f32 %v1742, %v1909
        %v1911 = vpop.f32.mrb[0].mxu0
        %1912 = vmatprep.mubr.bf16.mxu0 %v1700
        %1913 = vmatmul.mubr.bf16.gmra.mrb[0].mxu0 %v1699
        %v1914 = vpop.f32.mrb[0].mxu0
        %v1915 = vadd.f32 %v1742, %v1914
        %v1916 = vpop.f32.mrb[0].mxu0
        %v1917 = vpop.f32.mrb[0].mxu0
        %v1918 = vadd.f32 %v1742, %v1917
        %v1919 = vpop.f32.mrb[0].mxu0
        %1920 = vmatprep.mubr.bf16.mxu0 %v1702
        %1921 = vmatmul.mubr.bf16.gmra.mrb[0].mxu0 %v1701
        %v1922 = vpop.f32.mrb[0].mxu0
        %v1923 = vadd.f32 %v1742, %v1922
        %v1924 = vpop.f32.mrb[0].mxu0
        %v1925 = vpop.f32.mrb[0].mxu0
        %v1926 = vadd.f32 %v1742, %v1925
        %v1927 = vpop.f32.mrb[0].mxu0
        %1928 = vmatprep.mubr.bf16.mxu0 %v1704
        %1929 = vmatmul.mubr.bf16.gmra.mrb[0].mxu0 %v1703
        %v1930 = vpop.f32.mrb[0].mxu0
        %v1931 = vadd.f32 %v1742, %v1930
        %v1932 = vpop.f32.mrb[0].mxu0
        %v1933 = vpop.f32.mrb[0].mxu0
        %v1934 = vadd.f32 %v1742, %v1933
        %v1935 = vpop.f32.mrb[0].mxu0
        %1936 = vdwg.mxu0
        %v1937 = vsub.f32 0.0, %v1875
        %v1938 = vsub.f32 0.0, %v1878
        %v1939 = vsub.f32 0.0, %v1883
        %v1940 = vsub.f32 0.0, %v1886
        %v1941 = vsub.f32 0.0, %v1891
        %v1942 = vsub.f32 0.0, %v1894
        %v1943 = vsub.f32 0.0, %v1899
        %v1944 = vsub.f32 0.0, %v1902
        %v1945 = vsub.f32 0.0, %v1907
        %v1946 = vsub.f32 0.0, %v1910
        %v1947 = vsub.f32 0.0, %v1915
        %v1948 = vsub.f32 0.0, %v1918
        %v1949 = vsub.f32 0.0, %v1923
        %v1950 = vsub.f32 0.0, %v1926
        %v1951 = vsub.f32 0.0, %v1931
        %v1952 = vsub.f32 0.0, %v1934
        %v1953 = vmul.f32 %v1937, 1.442695
        %v1954 = vpow.pop %v1953
        %v1955 = vmul.f32 %v1938, 1.442695
        %v1956 = vpow.pop %v1955
        %v1957 = vmul.f32 %v1939, 1.442695
        %v1958 = vpow.pop %v1957
        %v1959 = vmul.f32 %v1940, 1.442695
        %v1960 = vpow.pop %v1959
        %v1961 = vmul.f32 %v1941, 1.442695
        %v1962 = vpow.pop %v1961
        %v1963 = vmul.f32 %v1942, 1.442695
        %v1964 = vpow.pop %v1963
        %v1965 = vmul.f32 %v1943, 1.442695
        %v1966 = vpow.pop %v1965
        %v1967 = vmul.f32 %v1944, 1.442695
        %v1968 = vpow.pop %v1967
        %v1969 = vmul.f32 %v1945, 1.442695
        %v1970 = vpow.pop %v1969
        %v1971 = vmul.f32 %v1946, 1.442695
        %v1972 = vpow.pop %v1971
        %v1973 = vmul.f32 %v1947, 1.442695
        %v1974 = vpow.pop %v1973
        %v1975 = vmul.f32 %v1948, 1.442695
        %v1976 = vpow.pop %v1975
        %v1977 = vmul.f32 %v1949, 1.442695
        %v1978 = vpow.pop %v1977
        %v1979 = vmul.f32 %v1950, 1.442695
        %v1980 = vpow.pop %v1979
        %v1981 = vmul.f32 %v1951, 1.442695
        %v1982 = vpow.pop %v1981
        %v1983 = vmul.f32 %v1952, 1.442695
        %v1984 = vpow.pop %v1983
        %v1985 = vadd.f32 %v1954, 1.0
        %v1986 = vadd.f32 %v1956, 1.0
        %v1987 = vadd.f32 %v1958, 1.0
        %v1988 = vadd.f32 %v1960, 1.0
        %v1989 = vadd.f32 %v1962, 1.0
        %v1990 = vadd.f32 %v1964, 1.0
        %v1991 = vadd.f32 %v1966, 1.0
        %v1992 = vadd.f32 %v1968, 1.0
        %v1993 = vadd.f32 %v1970, 1.0
        %v1994 = vadd.f32 %v1972, 1.0
        %v1995 = vadd.f32 %v1974, 1.0
        %v1996 = vadd.f32 %v1976, 1.0
        %v1997 = vadd.f32 %v1978, 1.0
        %v1998 = vadd.f32 %v1980, 1.0
        %v1999 = vadd.f32 %v1982, 1.0
        %v2000 = vadd.f32 %v1984, 1.0
        %v2001 = vrcp.pop %v1985
        %v2002 = vrcp.pop %v1986
        %v2003 = vrcp.pop %v1987
        %v2004 = vrcp.pop %v1988
        %v2005 = vrcp.pop %v1989
        %v2006 = vrcp.pop %v1990
        %v2007 = vrcp.pop %v1991
        %v2008 = vrcp.pop %v1992
        %v2009 = vrcp.pop %v1993
        %v2010 = vrcp.pop %v1994
        %v2011 = vrcp.pop %v1995
        %v2012 = vrcp.pop %v1996
        %v2013 = vrcp.pop %v1997
        %v2014 = vrcp.pop %v1998
        %v2015 = vrcp.pop %v1999
        %v2016 = vrcp.pop %v2000
        %v2017 = vpack.c.bf16 %v2002, %v2001
        %v2018 = vpack.c.bf16 %v2004, %v2003
        %v2019 = vpack.c.bf16 %v2006, %v2005
        %v2020 = vpack.c.bf16 %v2008, %v2007
        %v2021 = vpack.c.bf16 %v2010, %v2009
        %v2022 = vpack.c.bf16 %v2012, %v2011
        %v2023 = vpack.c.bf16 %v2014, %v2013
        %v2024 = vpack.c.bf16 %v2016, %v2015
        %v2025 = vld [vmem:[%s5] sm:$0xf]
        %v2026 = vld [vmem:[%s5 + $0x4] sm:$0xf]
        %v2027 = vld [vmem:[%s5 + $0x8] sm:$0xf]
        %v2028 = vld [vmem:[%s5 + $0xc] sm:$0xf]
        %v2029 = vld [vmem:[%s5 + $0x10] sm:$0xf]
        %v2030 = vld [vmem:[%s5 + $0x14] sm:$0xf]
        %v2031 = vld [vmem:[%s5 + $0x18] sm:$0xf]
        %v2032 = vld [vmem:[%s5 + $0x1c] sm:$0xf]
        %v2033 = vld [vmem:[%s5 + $0x20] sm:$0xf]
        %v2034 = vld [vmem:[%s5 + $0x24] sm:$0xf]
        %v2035 = vld [vmem:[%s5 + $0x28] sm:$0xf]
        %v2036 = vld [vmem:[%s5 + $0x2c] sm:$0xf]
        %v2037 = vld [vmem:[%s5 + $0x30] sm:$0xf]
        %v2038 = vld [vmem:[%s5 + $0x34] sm:$0xf]
        %v2039 = vld [vmem:[%s5 + $0x38] sm:$0xf]
        %v2040 = vld [vmem:[%s5 + $0x3c] sm:$0xf]
        %v2041 = vld [vmem:[%s6] sm:$0x1]
        %v2043 = vlaneseq
        %v2044 = vshrl.u32 %v2043, 7
        %v2045 = vsub.s32 0, %v2044
        %v2046 = vrot.slane %v2041, %v2045
        %v2064 = vunpack.c.l.b16 %v2025
        %v2065 = vunpack.c.l.b16 %v2026
        %v2066 = vunpack.c.l.b16 %v2027
        %v2067 = vunpack.c.l.b16 %v2028
        %v2068 = vunpack.c.l.b16 %v2029
        %v2069 = vunpack.c.l.b16 %v2030
        %v2070 = vunpack.c.l.b16 %v2031
        %v2071 = vunpack.c.l.b16 %v2032
        %v2072 = vunpack.c.l.b16 %v2033
        %v2073 = vunpack.c.l.b16 %v2034
        %v2074 = vunpack.c.l.b16 %v2035
        %v2075 = vunpack.c.l.b16 %v2036
        %v2076 = vunpack.c.l.b16 %v2037
        %v2077 = vunpack.c.l.b16 %v2038
        %v2078 = vunpack.c.l.b16 %v2039
        %v2079 = vunpack.c.l.b16 %v2040
        %v2080 = vpack.c.b16 %v2065, %v2064
        %v2081 = vpack.c.b16 %v2067, %v2066
        %v2082 = vpack.c.b16 %v2069, %v2068
        %v2083 = vpack.c.b16 %v2071, %v2070
        %v2084 = vpack.c.b16 %v2073, %v2072
        %v2085 = vpack.c.b16 %v2075, %v2074
        %v2086 = vpack.c.b16 %v2077, %v2076
        %v2087 = vpack.c.b16 %v2079, %v2078
        %2096 = vmatprep.subr.bf16.mxu0 0
        %2097 = vmatpush1.bf16.msra.mxu0 %v2080
        %2098 = vmatprep.subr.bf16.mxu0 0
        %2099 = vmatpush1.bf16.msra.mxu0 %v2081
        %2100 = vmatprep.subr.bf16.mxu0 0
        %2101 = vmatpush1.bf16.msra.mxu0 %v2082
        %2102 = vmatprep.subr.bf16.mxu0 0
        %2103 = vmatpush1.bf16.msra.mxu0 %v2083
        %2104 = vmatprep.subr.bf16.mxu0 0
        %2105 = vmatpush1.bf16.msra.mxu0 %v2084
        %2106 = vmatprep.subr.bf16.mxu0 0
        %2107 = vmatpush1.bf16.msra.mxu0 %v2085
        %2108 = vmatprep.subr.bf16.mxu0 0
        %2109 = vmatpush1.bf16.msra.mxu0 %v2086
        %2110 = vmatprep.subr.bf16.mxu0 0
        %2111 = vmatpush1.bf16.msra.mxu0 %v2087
        %2112 = vmatprep.subr.bf16.mxu0 0
        %2113 = vmatpush1.bf16.msra.mxu0 0
        %2114 = vmatprep.subr.bf16.mxu0 0
        %2115 = vmatpush1.bf16.msra.mxu0 0
        %2116 = vmatprep.subr.bf16.mxu0 0
        %2117 = vmatpush1.bf16.msra.mxu0 0
        %2118 = vmatprep.subr.bf16.mxu0 0
        %2119 = vmatpush1.bf16.msra.mxu0 0
        %2120 = vmatprep.subr.bf16.mxu0 0
        %2121 = vmatpush1.bf16.msra.mxu0 0
        %2122 = vmatprep.subr.bf16.mxu0 0
        %2123 = vmatpush1.bf16.msra.mxu0 0
        %2124 = vmatprep.subr.bf16.mxu0 0
        %2125 = vmatpush1.bf16.msra.mxu0 0
        %2126 = vmatprep.subr.bf16.mxu0 0
        %2127 = vmatpush1.bf16.msra.mxu0 0
        %2128 = vmatprep.mubr.bf16.mxu0 0
        %2129 = vmatmul.mubr.bf16.gmra.mrb[0].mxu0 %v2017
        %v2130 = vpop.f32.mrb[0].mxu0
        %v2131 = vadd.f32 %v2046, %v2130
        %v2132 = vpop.f32.mrb[0].mxu0
        %v2133 = vpop.f32.mrb[0].mxu0
        %v2134 = vadd.f32 %v2046, %v2133
        %v2135 = vpop.f32.mrb[0].mxu0
        %2136 = vmatprep.mubr.bf16.mxu0 0
        %2137 = vmatmul.mubr.bf16.gmra.mrb[0].mxu0 %v2018
        %v2138 = vpop.f32.mrb[0].mxu0
        %v2139 = vadd.f32 %v2046, %v2138
        %v2140 = vpop.f32.mrb[0].mxu0
        %v2141 = vpop.f32.mrb[0].mxu0
        %v2142 = vadd.f32 %v2046, %v2141
        %v2143 = vpop.f32.mrb[0].mxu0
        %2144 = vmatprep.mubr.bf16.mxu0 0
        %2145 = vmatmul.mubr.bf16.gmra.mrb[0].mxu0 %v2019
        %v2146 = vpop.f32.mrb[0].mxu0
        %v2147 = vadd.f32 %v2046, %v2146
        %v2148 = vpop.f32.mrb[0].mxu0
        %v2149 = vpop.f32.mrb[0].mxu0
        %v2150 = vadd.f32 %v2046, %v2149
        %v2151 = vpop.f32.mrb[0].mxu0
        %2152 = vmatprep.mubr.bf16.mxu0 0
        %2153 = vmatmul.mubr.bf16.gmra.mrb[0].mxu0 %v2020
        %v2154 = vpop.f32.mrb[0].mxu0
        %v2155 = vadd.f32 %v2046, %v2154
        %v2156 = vpop.f32.mrb[0].mxu0
        %v2157 = vpop.f32.mrb[0].mxu0
        %v2158 = vadd.f32 %v2046, %v2157
        %v2159 = vpop.f32.mrb[0].mxu0
        %2160 = vmatprep.mubr.bf16.mxu0 0
        %2161 = vmatmul.mubr.bf16.gmra.mrb[0].mxu0 %v2021
        %v2162 = vpop.f32.mrb[0].mxu0
        %v2163 = vadd.f32 %v2046, %v2162
        %v2164 = vpop.f32.mrb[0].mxu0
        %v2165 = vpop.f32.mrb[0].mxu0
        %v2166 = vadd.f32 %v2046, %v2165
        %v2167 = vpop.f32.mrb[0].mxu0
        %2168 = vmatprep.mubr.bf16.mxu0 0
        %2169 = vmatmul.mubr.bf16.gmra.mrb[0].mxu0 %v2022
        %v2170 = vpop.f32.mrb[0].mxu0
        %v2171 = vadd.f32 %v2046, %v2170
        %v2172 = vpop.f32.mrb[0].mxu0
        %v2173 = vpop.f32.mrb[0].mxu0
        %v2174 = vadd.f32 %v2046, %v2173
        %v2175 = vpop.f32.mrb[0].mxu0
        %2176 = vmatprep.mubr.bf16.mxu0 0
        %2177 = vmatmul.mubr.bf16.gmra.mrb[0].mxu0 %v2023
        %v2178 = vpop.f32.mrb[0].mxu0
        %v2179 = vadd.f32 %v2046, %v2178
        %v2180 = vpop.f32.mrb[0].mxu0
        %v2181 = vpop.f32.mrb[0].mxu0
        %v2182 = vadd.f32 %v2046, %v2181
        %v2183 = vpop.f32.mrb[0].mxu0
        %2184 = vmatprep.mubr.bf16.mxu0 0
        %2185 = vmatmul.mubr.bf16.gmra.mrb[0].mxu0 %v2024
        %v2186 = vpop.f32.mrb[0].mxu0
        %v2187 = vadd.f32 %v2046, %v2186
        %v2188 = vpop.f32.mrb[0].mxu0
        %v2189 = vpop.f32.mrb[0].mxu0
        %v2190 = vadd.f32 %v2046, %v2189
        %v2191 = vpop.f32.mrb[0].mxu0
        %2192 = vdwg.mxu0
        %v2193 = vsub.f32 0.0, %v2131
        %v2194 = vsub.f32 0.0, %v2134
        %v2195 = vsub.f32 0.0, %v2139
        %v2196 = vsub.f32 0.0, %v2142
        %v2197 = vsub.f32 0.0, %v2147
        %v2198 = vsub.f32 0.0, %v2150
        %v2199 = vsub.f32 0.0, %v2155
        %v2200 = vsub.f32 0.0, %v2158
        %v2201 = vsub.f32 0.0, %v2163
        %v2202 = vsub.f32 0.0, %v2166
        %v2203 = vsub.f32 0.0, %v2171
        %v2204 = vsub.f32 0.0, %v2174
        %v2205 = vsub.f32 0.0, %v2179
        %v2206 = vsub.f32 0.0, %v2182
        %v2207 = vsub.f32 0.0, %v2187
        %v2208 = vsub.f32 0.0, %v2190
        %v2209 = vmul.f32 %v2193, 1.442695
        %v2210 = vpow.pop %v2209
        %v2211 = vmul.f32 %v2194, 1.442695
        %v2212 = vpow.pop %v2211
        %v2213 = vmul.f32 %v2195, 1.442695
        %v2214 = vpow.pop %v2213
        %v2215 = vmul.f32 %v2196, 1.442695
        %v2216 = vpow.pop %v2215
        %v2217 = vmul.f32 %v2197, 1.442695
        %v2218 = vpow.pop %v2217
        %v2219 = vmul.f32 %v2198, 1.442695
        %v2220 = vpow.pop %v2219
        %v2221 = vmul.f32 %v2199, 1.442695
        %v2222 = vpow.pop %v2221
        %v2223 = vmul.f32 %v2200, 1.442695
        %v2224 = vpow.pop %v2223
        %v2225 = vmul.f32 %v2201, 1.442695
        %v2226 = vpow.pop %v2225
        %v2227 = vmul.f32 %v2202, 1.442695
        %v2228 = vpow.pop %v2227
        %v2229 = vmul.f32 %v2203, 1.442695
        %v2230 = vpow.pop %v2229
        %v2231 = vmul.f32 %v2204, 1.442695
        %v2232 = vpow.pop %v2231
        %v2233 = vmul.f32 %v2205, 1.442695
        %v2234 = vpow.pop %v2233
        %v2235 = vmul.f32 %v2206, 1.442695
        %v2236 = vpow.pop %v2235
        %v2237 = vmul.f32 %v2207, 1.442695
        %v2238 = vpow.pop %v2237
        %v2239 = vmul.f32 %v2208, 1.442695
        %v2240 = vpow.pop %v2239
        %v2241 = vadd.f32 %v2210, 1.0
        %v2242 = vadd.f32 %v2212, 1.0
        %v2243 = vadd.f32 %v2214, 1.0
        %v2244 = vadd.f32 %v2216, 1.0
        %v2245 = vadd.f32 %v2218, 1.0
        %v2246 = vadd.f32 %v2220, 1.0
        %v2247 = vadd.f32 %v2222, 1.0
        %v2248 = vadd.f32 %v2224, 1.0
        %v2249 = vadd.f32 %v2226, 1.0
        %v2250 = vadd.f32 %v2228, 1.0
        %v2251 = vadd.f32 %v2230, 1.0
        %v2252 = vadd.f32 %v2232, 1.0
        %v2253 = vadd.f32 %v2234, 1.0
        %v2254 = vadd.f32 %v2236, 1.0
        %v2255 = vadd.f32 %v2238, 1.0
        %v2256 = vadd.f32 %v2240, 1.0
        %v2257 = vrcp.pop %v2241
        %v2258 = vrcp.pop %v2242
        %v2259 = vrcp.pop %v2243
        %v2260 = vrcp.pop %v2244
        %v2261 = vrcp.pop %v2245
        %v2262 = vrcp.pop %v2246
        %v2263 = vrcp.pop %v2247
        %v2264 = vrcp.pop %v2248
        %v2265 = vrcp.pop %v2249
        %v2266 = vrcp.pop %v2250
        %v2267 = vrcp.pop %v2251
        %v2268 = vrcp.pop %v2252
        %v2269 = vrcp.pop %v2253
        %v2270 = vrcp.pop %v2254
        %v2271 = vrcp.pop %v2255
        %v2272 = vrcp.pop %v2256
        %v2273 = vpack.c.bf16 %v2258, %v2257
        %v2274 = vpack.c.bf16 %v2260, %v2259
        %v2275 = vpack.c.bf16 %v2262, %v2261
        %v2276 = vpack.c.bf16 %v2264, %v2263
        %v2277 = vpack.c.bf16 %v2266, %v2265
        %v2278 = vpack.c.bf16 %v2268, %v2267
        %v2279 = vpack.c.bf16 %v2270, %v2269
        %v2280 = vpack.c.bf16 %v2272, %v2271
        %v2289 = vunpack.c.l.b16 %v2273
        %v2290 = vunpack.c.h.b16 %v2273
        %v2291 = vunpack.c.l.b16 %v2274
        %v2292 = vunpack.c.h.b16 %v2274
        %v2293 = vunpack.c.l.b16 %v2275
        %v2294 = vunpack.c.h.b16 %v2275
        %v2295 = vunpack.c.l.b16 %v2276
        %v2296 = vunpack.c.h.b16 %v2276
        %v2297 = vunpack.c.l.b16 %v2277
        %v2298 = vunpack.c.h.b16 %v2277
        %v2299 = vunpack.c.l.b16 %v2278
        %v2300 = vunpack.c.h.b16 %v2278
        %v2301 = vunpack.c.l.b16 %v2279
        %v2302 = vunpack.c.h.b16 %v2279
        %v2303 = vunpack.c.l.b16 %v2280
        %v2304 = vunpack.c.h.b16 %v2280
        %v2305 = vpack.c.b16 %v2289, %v2289
        %v2306 = vpack.c.b16 %v2290, %v2290
        %v2307 = vpack.c.b16 %v2291, %v2291
        %v2308 = vpack.c.b16 %v2292, %v2292
        %v2309 = vpack.c.b16 %v2293, %v2293
        %v2310 = vpack.c.b16 %v2294, %v2294
        %v2311 = vpack.c.b16 %v2295, %v2295
        %v2312 = vpack.c.b16 %v2296, %v2296
        %v2313 = vpack.c.b16 %v2297, %v2297
        %v2314 = vpack.c.b16 %v2298, %v2298
        %v2315 = vpack.c.b16 %v2299, %v2299
        %v2316 = vpack.c.b16 %v2300, %v2300
        %v2317 = vpack.c.b16 %v2301, %v2301
        %v2318 = vpack.c.b16 %v2302, %v2302
        %v2319 = vpack.c.b16 %v2303, %v2303
        %v2320 = vpack.c.b16 %v2304, %v2304
        %2337 = vst [vmem:[%s274] sm:$0xf] %v2305
        %2338 = vst [vmem:[%s274 + $0x4] sm:$0xf] %v2306
        %2339 = vst [vmem:[%s274 + $0x8] sm:$0xf] %v2307
        %2340 = vst [vmem:[%s274 + $0xc] sm:$0xf] %v2308
        %2341 = vst [vmem:[%s274 + $0x10] sm:$0xf] %v2309
        %2342 = vst [vmem:[%s274 + $0x14] sm:$0xf] %v2310
        %2343 = vst [vmem:[%s274 + $0x18] sm:$0xf] %v2311
        %2344 = vst [vmem:[%s274 + $0x1c] sm:$0xf] %v2312
        %2345 = vst [vmem:[%s274 + $0x20] sm:$0xf] %v2313
        %2346 = vst [vmem:[%s274 + $0x24] sm:$0xf] %v2314
        %2347 = vst [vmem:[%s274 + $0x28] sm:$0xf] %v2315
        %2348 = vst [vmem:[%s274 + $0x2c] sm:$0xf] %v2316
        %2349 = vst [vmem:[%s274 + $0x30] sm:$0xf] %v2317
        %2350 = vst [vmem:[%s274 + $0x34] sm:$0xf] %v2318
        %2351 = vst [vmem:[%s274 + $0x38] sm:$0xf] %v2319
        %2352 = vst [vmem:[%s274 + $0x3c] sm:$0xf] %v2320
        %s2353 = sand.u32 %s181, 1
        %s2354 = scalar_lea.sflag [#allocation3], %s2353
        %s2355 = sand.u32 %s181, 1
        %s2356 = smul.addr %s2355, 64
        %s2357 = scalar_lea.vmem [#allocation2], %s2356
        // Predicated region
        $region49: #{tpu_custom_call.1} parent=47 // pred_check
          %p2358 = pneg %p191
        $region50: #{tpu_custom_call.1} parent=47 // pred_check_branch
          %2360 = sbr.rel (%p2358) target = $region52
        $region51: #{tpu_custom_call.1} parent=47 // pred_region
          %s2361 = smul.u32 16, %s21
          %s2363 = ssub.s32 1024, 1024
          %2364 = vsyncadd %s2354, %s2363
          %s2365 = smul.addr %s2361, 64
          %s2366 = scalar_lea.hbm %s7, %s2365
          %s2367 = sshll.u32 %s2357, 4
          %s2368 = int_to_ptr.vmem [resolvable:$true] %s2367
          %2373 = dma.vmem_to_hbm [thread:$0]  %s2368, 1024, %s2366, %s2354, 64, 64, 4
        $region52: #{tpu_custom_call.1} parent=47 // pred_fallthru
          _
      $region48: #{tpu_custom_call.1} parent=5 // pred_fallthru
        _
      %p2374 = scmp.le.s32.totalorder 2, %s16
      // Predicated region
      $region53: #{tpu_custom_call.1} parent=5 // pred_check
        %p2375 = pneg %p2374
      $region54: #{tpu_custom_call.1} parent=5 // pred_check_branch
        %2377 = sbr.rel (%p2375) target = $region56
      $region55: #{tpu_custom_call.1} parent=5 // pred_region
        %s2378 = ssub.s32 %s16, 2
        // Predicated region
        $region57: #{tpu_custom_call.1} parent=55 // pred_check
          %p2379 = pneg %p197
        $region58: #{tpu_custom_call.1} parent=55 // pred_check_branch
          %2381 = sbr.rel (%p2379) target = $region60
        $region59: #{tpu_custom_call.1} parent=55 // pred_region
          %s2382 = sand.u32 %s182, 1
          %s2383 = scalar_lea.sflag [#allocation3], %s2382
          %s2384 = sand.u32 %s182, 1
          %s2385 = smul.addr %s2384, 64
          %s2386 = scalar_lea.vmem [#allocation2], %s2385
          %2387 = dma.done %s2383, 1024
        $region60: #{tpu_custom_call.1} parent=55 // pred_fallthru
          _
      $region56: #{tpu_custom_call.1} parent=5 // pred_fallthru
        _
    $region6: #{tpu_custom_call.1} parent=1 // loop_footer
      %s20 = sadd.s32 1, %s16
    $region7: #{tpu_custom_call.1} parent=1 // loop_footer_branch
      %15 = sbr.rel target = $region3
    $region8: #{tpu_custom_call.1} parent=1 // loop_exit
      _
    %2388 = vsyncpa [#allocation3], 1
    %s2389 = scalar_lea.sflag [#allocation3], 1
    %2390 = vsyncpa %s2389, 1

</llo_original>
